<compile_context>
chip_gen: v7x
topology: tpu7x:2x2x1
jax: 0.10.0
libtpu: 0.0.40
codegen_flags: <defaults>
</compile_context>

<pallas_src>
import functools

import jax
import jax.numpy as jnp
from jax.experimental import pallas as pl
from jax.experimental.pallas import tpu as pltpu

SH_C0 = 0.28209479177387814

_LANE = 128
_SUBLANE = 8
_RESIDENT_VMEM_BUDGET = 16 * 1024 * 1024   # camera-resident gaussian data budget


def _round_up(x, m):
    return (x + m - 1) // m * m


# ----------------------------------------------------------------------------
# Pallas kernel: per-pixel gaussian splatting accumulation
# ----------------------------------------------------------------------------
def _splat_kernel(pix_ref, attr_ref, rhs_ref, bg_ref, out_ref, acc_ref,
                  *, resident, w_col):
    g = pl.program_id(2)

    @pl.when(g == 0)
    def _():
        acc_ref[...] = jnp.zeros_like(acc_ref)

    # gaussian-tile index inside the (possibly camera-resident) block
    gi = g if resident else 0
    attr = attr_ref[0, gi]            # (8, GT)  f32: [mx, my, ca', cb', cc', op, 0, 0]
    rhs = rhs_ref[0, gi]              # (GT, C_pad) bf16: [rgb | sem | 1 | pad]

    mx, my = attr[0:1, :], attr[1:2, :]
    ca, cb, cc = attr[2:3, :], attr[3:4, :], attr[4:5, :]
    op = attr[5:6, :]

    px = pix_ref[:, 0:1]              # (P, 1) pixel centres (precomputed)
    py = pix_ref[:, 1:2]

    dx = px - mx                      # (P, GT)
    dy = py - my
    # folded conic: power = -0.5*(a dx^2 + c dy^2) - b dx dy
    power = dx * (ca * dx + cb * dy) + cc * dy * dy
    alpha = jnp.minimum(op * jnp.exp(power), 0.99)
    w = jnp.where(power > 0.0, 0.0, alpha)            # (P, GT)

    # single fused MXU matmul: colors + semantics + weight-sum in one pass
    acc_ref[...] += jnp.dot(w.astype(rhs.dtype), rhs,
                            preferred_element_type=jnp.float32)

    @pl.when(g == pl.num_programs(2) - 1)
    def _():
        acc = acc_ref[...]                                    # (P, C_pad)
        transmit = jnp.clip(1.0 - acc[:, w_col:w_col + 1], 0.0, 1.0)
        final = acc + transmit * bg_ref[0]                    # bg row non-zero only on rgb
        out_ref[0] = final.T                                  # lane-dense (C_pad, P) store


# ----------------------------------------------------------------------------
# Wrapper around pallas_call: packing, tiling, residency / VMEM budgeting
# ----------------------------------------------------------------------------
def render_pallas(attrs, colors, sems, background, image_shape, *,
                  pixel_tile=512, gauss_tile=256, rhs_dtype=jnp.bfloat16):
    H, W = image_shape
    BV, _, G = attrs.shape
    Dsem = sems.shape[-1]
    HW = H * W

    # ---- tile choices (clamped + aligned) ----------------------------------
    pixel_tile = max(_LANE, (pixel_tile // _LANE) * _LANE)
    pixel_tile = min(pixel_tile, _round_up(HW, _LANE))
    HW_pad = _round_up(HW, pixel_tile)

    gauss_tile = max(_LANE, (gauss_tile // _LANE) * _LANE)
    gauss_tile = min(gauss_tile, _round_up(G, _LANE))
    G_pad = _round_up(G, gauss_tile)
    n_gt = G_pad // gauss_tile

    C_rhs = 3 + Dsem + 1                      # rgb + semantics + ones (weight sum)
    C_pad = _round_up(C_rhs, _SUBLANE)
    w_col = 3 + Dsem

    # ---- packed gaussian attributes: (BV, n_gt, 8, gauss_tile) -------------
    attrs_p = jnp.pad(attrs, ((0, 0), (0, 0), (0, G_pad - G)))
    attrs_p = attrs_p.reshape(BV, 8, n_gt, gauss_tile).transpose(0, 2, 1, 3)

    # ---- fused bf16 RHS: (BV, n_gt, gauss_tile, C_pad) ----------------------
    ones = jnp.ones((BV, G, 1), jnp.float32)
    rhs = jnp.concatenate([colors, sems, ones], axis=-1)          # (BV, G, C_rhs)
    rhs = jnp.pad(rhs, ((0, 0), (0, G_pad - G), (0, C_pad - C_rhs)))
    rhs = rhs.reshape(BV, n_gt, gauss_tile, C_pad).astype(rhs_dtype)

    # ---- precomputed pixel centres (indexed only by the pixel-tile axis) ----
    pid = jnp.arange(HW_pad, dtype=jnp.int32)
    pix = jnp.stack([(pid % W).astype(jnp.float32) + 0.5,
                     (pid // W).astype(jnp.float32) + 0.5], axis=-1)   # (HW_pad, 2)

    # ---- background row (non-zero only on the 3 color channels) -------------
    bg_row = jnp.zeros((BV, 1, C_pad), jnp.float32)
    bg_row = bg_row.at[:, 0, 0:3].set(background)

    # ---- camera-residency decision (padded, double-buffered VMEM bytes) -----
    rhs_itemsize = jnp.dtype(rhs_dtype).itemsize
    attr_blk_bytes = 8 * gauss_tile * 4
    rhs_blk_bytes = gauss_tile * _round_up(C_pad, _LANE) * rhs_itemsize
    resident_bytes = 2 * n_gt * (attr_blk_bytes + rhs_blk_bytes)
    resident = resident_bytes <= _RESIDENT_VMEM_BUDGET

    if resident:
        # attributes / RHS DMA'd once per camera; kernel indexes tile gi = g
        attr_spec = pl.BlockSpec((1, n_gt, 8, gauss_tile),
                                 lambda cam, p, g: (cam, 0, 0, 0))
        rhs_spec = pl.BlockSpec((1, n_gt, gauss_tile, C_pad),
                                lambda cam, p, g: (cam, 0, 0, 0))
    else:
        # large G * Dsem (e.g. CLIP features on v7x's 64 MiB VMEM): stay g-tiled
        attr_spec = pl.BlockSpec((1, 1, 8, gauss_tile),
                                 lambda cam, p, g: (cam, g, 0, 0))
        rhs_spec = pl.BlockSpec((1, 1, gauss_tile, C_pad),
                                lambda cam, p, g: (cam, g, 0, 0))

    # ---- explicit VMEM budget ------------------------------------------------
    dbuf = 2
    vmem_need = (
        (n_gt if resident else 1) * (attr_blk_bytes + rhs_blk_bytes) * dbuf
        + pixel_tile * _LANE * 4 * dbuf                       # pix block (lane-padded)
        + C_pad * pixel_tile * 4 * dbuf                       # out block
        + pixel_tile * _round_up(C_pad, _LANE) * 4            # acc scratch
        + _SUBLANE * _LANE * 4 * dbuf                         # bg row
        + 8 * pixel_tile * gauss_tile * 4                     # (P, GT) f32 intermediates
    )
    vmem_limit = int(min(max(vmem_need + (4 << 20), 32 << 20), 48 << 20))

    cost = pl.CostEstimate(
        flops=2 * BV * HW_pad * G_pad * (C_pad + 8),
        transcendentals=BV * HW_pad * G_pad,
        bytes_accessed=int(attrs_p.size * 4 + rhs.size * rhs_itemsize
                           + pix.size * 4 + BV * C_pad * HW_pad * 4),
    )

    kern = functools.partial(_splat_kernel, resident=resident, w_col=w_col)
    out = pl.pallas_call(
        kern,
        out_shape=jax.ShapeDtypeStruct((BV, C_pad, HW_pad), jnp.float32),
        grid_spec=pltpu.PrefetchScalarGridSpec(
            num_scalar_prefetch=0,
            grid=(BV, HW_pad // pixel_tile, n_gt),
            in_specs=[
                pl.BlockSpec((pixel_tile, 2), lambda cam, p, g: (p, 0)),
                attr_spec,
                rhs_spec,
                pl.BlockSpec((1, 1, C_pad), lambda cam, p, g: (cam, 0, 0)),
            ],
            out_specs=pl.BlockSpec((1, C_pad, pixel_tile),
                                   lambda cam, p, g: (cam, 0, p)),
            scratch_shapes=[pltpu.VMEM((pixel_tile, C_pad), jnp.float32)],
        ),
        compiler_params=pltpu.CompilerParams(
            dimension_semantics=("parallel", "parallel", "arbitrary"),
            vmem_limit_bytes=vmem_limit),
        cost_estimate=cost,
    )(pix, attrs_p, rhs, bg_row)

    out = out[:, :, :HW]
    color = out[:, 0:3, :].reshape(BV, 3, H, W)          # already NCHW: no transpose
    sem = out[:, 3:3 + Dsem, :].reshape(BV, Dsem, H, W)
    return color, sem


# ----------------------------------------------------------------------------
# JAX glue: camera math + EWA projection of 3D gaussians into each target view
# ----------------------------------------------------------------------------
def normalize_intrinsics(intr, image_shape):
    h, w = image_shape
    scale = jnp.array([w, h, 1.0], dtype=intr.dtype).reshape(3, 1)
    return intr / scale


def _project_gaussians(c2w, K_norm, means, covs, shs, opac, image_shape, near, far):
    # c2w (N,4,4); K_norm (N,3,3) normalized intrinsics
    # means (N,G,3), covs (N,G,3,3), shs (N,G,3,d_sh), opac (N,G)
    H, W = image_shape
    w2c = jnp.linalg.inv(c2w)
    R = w2c[:, :3, :3]
    t = w2c[:, :3, 3]
    p_cam = jnp.einsum('nij,ngj->ngi', R, means) + t[:, None, :]
    x, y, z = p_cam[..., 0], p_cam[..., 1], p_cam[..., 2]
    zc = jnp.maximum(z, 1e-6)

    fx = K_norm[:, 0, 0] * W
    fy = K_norm[:, 1, 1] * H
    cx = K_norm[:, 0, 2] * W
    cy = K_norm[:, 1, 2] * H
    u = fx[:, None] * x / zc + cx[:, None]
    v = fy[:, None] * y / zc + cy[:, None]

    # EWA 2D covariance: J W Sigma W^T J^T
    zeros = jnp.zeros_like(x)
    J = jnp.stack([
        jnp.stack([fx[:, None] / zc, zeros, -fx[:, None] * x / (zc * zc)], axis=-1),
        jnp.stack([zeros, fy[:, None] / zc, -fy[:, None] * y / (zc * zc)], axis=-1),
    ], axis=-2)                                           # (N, G, 2, 3)
    Tm = jnp.einsum('ngij,njk->ngik', J, R)
    cov2d = jnp.einsum('ngij,ngjk,nglk->ngil', Tm, covs, Tm)
    cov2d = cov2d + 0.3 * jnp.eye(2, dtype=cov2d.dtype)   # low-pass, as in the CUDA rasterizer

    a = cov2d[..., 0, 0]
    bb = cov2d[..., 0, 1]
    cdd = cov2d[..., 1, 1]
    det = a * cdd - bb * bb
    det_ok = det > 1e-12
    inv_det = jnp.where(det_ok, 1.0 / jnp.where(det_ok, det, 1.0), 0.0)
    conic_a = cdd * inv_det
    conic_b = -bb * inv_det
    conic_c = a * inv_det

    # TODO(synk): only SH band 0 (view-independent color) and order-independent
    # compositing are implemented; exact depth-sorted alpha blending and per-tile
    # culling of the CUDA rasterizer (and higher-order SH) are not reproduced.
    color = jnp.maximum(SH_C0 * shs[..., 0] + 0.5, 0.0)   # (N, G, 3)

    valid = (z > near) & (z < far) & det_ok
    opac_eff = opac * valid.astype(jnp.float32)

    zero_row = jnp.zeros_like(u)
    # Fold the -0.5 scale / signs of the conic into the packed attributes so the
    # kernel's O(HW*G) inner loop saves VALU ops.
    attrs = jnp.stack([u, v,
                       -0.5 * conic_a, -conic_b, -0.5 * conic_c,
                       opac_eff, zero_row, zero_row], axis=1)   # (N, 8, G)
    return attrs, color


class DecoderSplattingCUDA:
    def __init__(self, background_color):
        self.background_color = jnp.asarray(background_color, dtype=jnp.float32)

    def forward(self, batch, pred1, pred2, image_shape):
        base_pose = batch['context'][0]['camera_pose']                  # (b, 4, 4)
        inv_base_pose = jnp.linalg.inv(base_pose)
        extrinsics = jnp.stack([tv['camera_pose'] for tv in batch['target']], axis=1)       # (b, v, 4, 4)
        intrinsics = jnp.stack([tv['camera_intrinsics'] for tv in batch['target']], axis=1)  # (b, v, 3, 3)
        intrinsics = normalize_intrinsics(intrinsics, image_shape)[..., :3, :3]
        extrinsics = inv_base_pose[:, None, :, :] @ extrinsics

        means = jnp.stack([pred1['means'], pred2['means_in_other_view']], axis=1)   # (b, 2, h, w, 3)
        covariances = jnp.stack([pred1['covariances'], pred2['covariances']], axis=1)
        harmonics = jnp.stack([pred1['sh'], pred2['sh']], axis=1)
        opacities = jnp.stack([pred1['opacities'], pred2['opacities']], axis=1)
        lang = jnp.stack([pred1['clip_features'], pred2['clip_features']], axis=1)

        b, v = extrinsics.shape[:2]
        h, w = image_shape
        near, far = 0.1, 1000.0
        G = means.shape[1] * means.shape[2] * means.shape[3]            # 2 * h * w

        means_g = means.reshape(b, G, 3)
        covs_g = covariances.reshape(b, G, 3, 3)
        sh_g = harmonics.reshape(b, G, 3, harmonics.shape[-1])
        opac_g = opacities.reshape(b, G)
        sem_g = lang.reshape(b, G, lang.shape[-1])

        def rep(x):  # 'b g ... -> (b v) g ...'
            return jnp.broadcast_to(x[:, None], (b, v) + x.shape[1:]).reshape((b * v,) + x.shape[1:])

        means_f, covs_f, sh_f, opac_f, sem_f = map(rep, (means_g, covs_g, sh_g, opac_g, sem_g))
        extr_f = extrinsics.reshape(b * v, 4, 4)
        intr_f = intrinsics.reshape(b * v, 3, 3)
        bg_f = jnp.broadcast_to(self.background_color[None, :], (b * v, 3))

        attrs, color = _project_gaussians(
            extr_f, intr_f, means_f, covs_f, sh_f, opac_f, image_shape, near, far)

        # TODO(synk): semantics are composited without a background/transmittance
        # term, matching the previous implementation of this decoder.
        color_chw, sem_chw = render_pallas(attrs, color, sem_f, bg_f, image_shape)

        color_out = color_chw.reshape(b, v, 3, h, w)
        sem_out = sem_chw.reshape(b, v, sem_chw.shape[1], h, w)
        return color_out, sem_out, None


# ----------------------------------------------------------------------------
# Deterministic example
# ----------------------------------------------------------------------------
if __name__ == "__main__":
    key = jax.random.PRNGKey(0)
    b, v = 2, 2              # batch, number of target views
    h = w = 16               # image shape
    d_sh, d_sem = 4, 8       # SH coeffs per channel, clip-feature dim
    image_shape = (h, w)
    keys = jax.random.split(key, 8)

    def make_pose(k, n):
        t = 0.05 * jax.random.normal(k, (n, 3))
        pose = jnp.tile(jnp.eye(4, dtype=jnp.float32)[None], (n, 1, 1))
        return pose.at[:, :3, 3].set(t)

    K_px = jnp.array([[float(w), 0.0, w / 2.0],
                      [0.0, float(h), h / 2.0],
                      [0.0, 0.0, 1.0]], dtype=jnp.float32)
    batch = {
        'context': [{'camera_pose': make_pose(keys[0], b)}],
        'target': [{'camera_pose': make_pose(keys[1 + i], b),
                    'camera_intrinsics': jnp.tile(K_px[None], (b, 1, 1))}
                   for i in range(v)],
    }

    def make_pred(k, other=False):
        k1, k2, k3, k4, k5, k6 = jax.random.split(k, 6)
        xy = jax.random.uniform(k1, (b, h, w, 2), minval=-1.0, maxval=1.0)
        z = jax.random.uniform(k2, (b, h, w, 1), minval=2.0, maxval=4.0)
        means = jnp.concatenate([xy, z], axis=-1).astype(jnp.float32)
        A = 0.05 * jax.random.normal(k3, (b, h, w, 3, 3))
        covs = (0.01 * jnp.eye(3) + jnp.einsum('...ij,...kj->...ik', A, A)).astype(jnp.float32)
        sh = (0.5 * jax.random.normal(k4, (b, h, w, 3, d_sh))).astype(jnp.float32)
        opac = jax.random.uniform(k5, (b, h, w, 1), minval=0.3, maxval=0.9).astype(jnp.float32)
        clip = jax.random.normal(k6, (b, h, w, d_sem)).astype(jnp.float32)
        pred = {'covariances': covs, 'sh': sh, 'opacities': opac, 'clip_features': clip}
        pred['means_in_other_view' if other else 'means'] = means
        return pred

    pred1 = make_pred(keys[4], other=False)
    pred2 = make_pred(keys[5], other=True)

    decoder = DecoderSplattingCUDA(background_color=[0.0, 0.0, 0.0])
    color, semantics, _ = decoder.forward(batch, pred1, pred2, image_shape)
    color = jax.block_until_ready(color)
    semantics = jax.block_until_ready(semantics)

    assert color.shape == (b, v, 3, h, w), color.shape
    assert semantics.shape == (b, v, d_sem, h, w), semantics.shape
    assert bool(jnp.all(jnp.isfinite(color))) and bool(jnp.all(jnp.isfinite(semantics)))
    print("KERNEL_OK")
</pallas_src>

<mosaic_0001>
module attributes {stable_mosaic.version = 11 : i64} {
  func.func @_splat_kernel(%arg0: i32, %arg1: i32, %arg2: i32, %arg3: memref<256x2xf32, #tpu.memory_space<vmem>>, %arg4: memref<1x2x8x256xf32, #tpu.memory_space<vmem>>, %arg5: memref<1x2x256x16xbf16, #tpu.memory_space<vmem>>, %arg6: memref<1x1x16xf32, #tpu.memory_space<vmem>>, %arg7: memref<1x16x256xf32, #tpu.memory_space<vmem>>, %arg8: memref<256x16xf32, #tpu.memory_space<vmem>>) attributes {dimension_semantics = [#tpu.dimension_semantics<parallel>, #tpu.dimension_semantics<parallel>, #tpu.dimension_semantics<arbitrary>], iteration_bounds = array<i64: 4, 1, 2>, scalar_prefetch = 0 : i64, scratch_operands = 1 : i64, tpu.core_type = #tpu.core_type<tc>, window_params = [{transform_indices = @transform_0, window_bounds = array<i64: 256, 2>}, {transform_indices = @transform_1, window_bounds = array<i64: 1, 2, 8, 256>}, {transform_indices = @transform_2, window_bounds = array<i64: 1, 2, 256, 16>}, {transform_indices = @transform_3, window_bounds = array<i64: 1, 1, 16>}, {transform_indices = @transform_4, window_bounds = array<i64: 1, 16, 256>}]} {
    %c0_i32 = arith.constant 0 : i32
    %0 = arith.cmpi eq, %arg2, %c0_i32 : i32
    %1 = arith.extui %0 : i1 to i32
    %c0_i32_0 = arith.constant 0 : i32
    %2 = arith.cmpi ne, %1, %c0_i32_0 : i32
    scf.if %2 {
      %cst_17 = arith.constant 0.000000e+00 : f32
      %50 = vector.broadcast %cst_17 : f32 to vector<256x16xf32>
      %c0_18 = arith.constant 0 : index
      %c0_19 = arith.constant 0 : index
      %51 = vector.load %arg8[%c0_18, %c0_19] : memref<256x16xf32, #tpu.memory_space<vmem>>, vector<256x16xf32>
      tpu.vector_store %arg8[%c0_18, %c0_19], %50 {strides = array<i32>} : memref<256x16xf32, #tpu.memory_space<vmem>>, vector<256x16xf32>,
    } else {
    }
    %c0 = arith.constant 0 : index
    %3 = arith.index_cast %arg2 : i32 to index
    %c0_1 = arith.constant 0 : index
    %c0_2 = arith.constant 0 : index
    %4 = vector.load %arg4[%c0, %3, %c0_1, %c0_2] : memref<1x2x8x256xf32, #tpu.memory_space<vmem>>, vector<1x1x8x256xf32>
    %5 = vector.shape_cast %4 : vector<1x1x8x256xf32> to vector<8x256xf32>
    %c0_3 = arith.constant 0 : index
    %6 = arith.index_cast %arg2 : i32 to index
    %c0_4 = arith.constant 0 : index
    %c0_5 = arith.constant 0 : index
    %7 = vector.load %arg5[%c0_3, %6, %c0_4, %c0_5] : memref<1x2x256x16xbf16, #tpu.memory_space<vmem>>, vector<1x1x256x16xbf16>
    %8 = vector.shape_cast %7 : vector<1x1x256x16xbf16> to vector<256x16xbf16>
    %9 = vector.extract_strided_slice %5 {offsets = [0, 0], sizes = [1, 256], strides = [1, 1]} : vector<8x256xf32> to vector<1x256xf32>
    %10 = vector.extract_strided_slice %5 {offsets = [1, 0], sizes = [1, 256], strides = [1, 1]} : vector<8x256xf32> to vector<1x256xf32>
    %11 = vector.extract_strided_slice %5 {offsets = [2, 0], sizes = [1, 256], strides = [1, 1]} : vector<8x256xf32> to vector<1x256xf32>
    %12 = vector.extract_strided_slice %5 {offsets = [3, 0], sizes = [1, 256], strides = [1, 1]} : vector<8x256xf32> to vector<1x256xf32>
    %13 = vector.extract_strided_slice %5 {offsets = [4, 0], sizes = [1, 256], strides = [1, 1]} : vector<8x256xf32> to vector<1x256xf32>
    %14 = vector.extract_strided_slice %5 {offsets = [5, 0], sizes = [1, 256], strides = [1, 1]} : vector<8x256xf32> to vector<1x256xf32>
    %c0_6 = arith.constant 0 : index
    %c0_7 = arith.constant 0 : index
    %15 = vector.load %arg3[%c0_6, %c0_7] : memref<256x2xf32, #tpu.memory_space<vmem>>, vector<256x1xf32>
    %c0_8 = arith.constant 0 : index
    %c1 = arith.constant 1 : index
    %16 = vector.load %arg3[%c0_8, %c1] : memref<256x2xf32, #tpu.memory_space<vmem>>, vector<256x1xf32>
    %17 = vector.broadcast %15 : vector<256x1xf32> to vector<256x256xf32>
    %18 = vector.broadcast %9 : vector<1x256xf32> to vector<256x256xf32>
    %19 = arith.subf %17, %18 : vector<256x256xf32>
    %20 = vector.broadcast %16 : vector<256x1xf32> to vector<256x256xf32>
    %21 = vector.broadcast %10 : vector<1x256xf32> to vector<256x256xf32>
    %22 = arith.subf %20, %21 : vector<256x256xf32>
    %23 = vector.broadcast %11 : vector<1x256xf32> to vector<256x256xf32>
    %24 = arith.mulf %23, %19 : vector<256x256xf32>
    %25 = vector.broadcast %12 : vector<1x256xf32> to vector<256x256xf32>
    %26 = arith.mulf %25, %22 : vector<256x256xf32>
    %27 = arith.addf %24, %26 : vector<256x256xf32>
    %28 = arith.mulf %19, %27 : vector<256x256xf32>
    %29 = vector.broadcast %13 : vector<1x256xf32> to vector<256x256xf32>
    %30 = arith.mulf %29, %22 : vector<256x256xf32>
    %31 = arith.mulf %30, %22 : vector<256x256xf32>
    %32 = arith.addf %28, %31 : vector<256x256xf32>
    %33 = math.exp %32 : vector<256x256xf32>
    %34 = vector.broadcast %14 : vector<1x256xf32> to vector<256x256xf32>
    %35 = arith.mulf %34, %33 : vector<256x256xf32>
    %cst = arith.constant 9.900000e-01 : f32
    %36 = vector.broadcast %cst : f32 to vector<256x256xf32>
    %37 = arith.minimumf %35, %36 : vector<256x256xf32>
    %cst_9 = arith.constant 0.000000e+00 : f32
    %38 = vector.broadcast %cst_9 : f32 to vector<256x256xf32>
    %39 = arith.cmpf ogt, %32, %38 : vector<256x256xf32>
    %cst_10 = arith.constant 0.000000e+00 : f32
    %40 = vector.broadcast %cst_10 : f32 to vector<256x256xf32>
    %41 = arith.select %39, %40, %37 : vector<256x256xi1>, vector<256x256xf32>
    %c0_11 = arith.constant 0 : index
    %c0_12 = arith.constant 0 : index
    %42 = vector.load %arg8[%c0_11, %c0_12] : memref<256x16xf32, #tpu.memory_space<vmem>>, vector<256x16xf32>
    %43 = arith.truncf %41 : vector<256x256xf32> to vector<256x256xbf16>
    %cst_13 = arith.constant dense<0.000000e+00> : vector<256x16xf32>
    %44 = tpu.matmul %43, %8, %cst_13 {dimension_numbers = #tpu.dot_dimension_numbers<[1], [0], [0], [1], [0, 0, 1, 1], [], []>} : vector<256x256xbf16>, vector<256x16xbf16>, vector<256x16xf32> -> vector<256x16xf32>
    %45 = arith.addf %42, %44 : vector<256x16xf32>
    %c0_14 = arith.constant 0 : index
    %c0_15 = arith.constant 0 : index
    %46 = vector.load %arg8[%c0_14, %c0_15] : memref<256x16xf32, #tpu.memory_space<vmem>>, vector<256x16xf32>
    tpu.vector_store %arg8[%c0_14, %c0_15], %45 {strides = array<i32>} : memref<256x16xf32, #tpu.memory_space<vmem>>, vector<256x16xf32>,
    %c1_i32 = arith.constant 1 : i32
    %47 = arith.cmpi eq, %arg2, %c1_i32 : i32
    %48 = arith.extui %47 : i1 to i32
    %c0_i32_16 = arith.constant 0 : i32
    %49 = arith.cmpi ne, %48, %c0_i32_16 : i32
    scf.if %49 {
      %c0_17 = arith.constant 0 : index
      %c0_18 = arith.constant 0 : index
      %50 = vector.load %arg8[%c0_17, %c0_18] : memref<256x16xf32, #tpu.memory_space<vmem>>, vector<256x16xf32>
      %51 = vector.extract_strided_slice %50 {offsets = [0, 11], sizes = [256, 1], strides = [1, 1]} : vector<256x16xf32> to vector<256x1xf32>
      %cst_19 = arith.constant 1.000000e+00 : f32
      %52 = vector.broadcast %cst_19 : f32 to vector<256x1xf32>
      %53 = arith.subf %52, %51 : vector<256x1xf32>
      %cst_20 = arith.constant 0.000000e+00 : f32
      %cst_21 = arith.constant 1.000000e+00 : f32
      %54 = vector.broadcast %cst_20 : f32 to vector<256x1xf32>
      %55 = arith.maximumf %54, %53 : vector<256x1xf32>
      %56 = vector.broadcast %cst_21 : f32 to vector<256x1xf32>
      %57 = arith.minimumf %56, %55 : vector<256x1xf32>
      %c0_22 = arith.constant 0 : index
      %c0_23 = arith.constant 0 : index
      %c0_24 = arith.constant 0 : index
      %58 = vector.load %arg6[%c0_22, %c0_23, %c0_24] : memref<1x1x16xf32, #tpu.memory_space<vmem>>, vector<1x1x16xf32>
      %59 = vector.shape_cast %58 : vector<1x1x16xf32> to vector<1x16xf32>
      %60 = vector.broadcast %57 : vector<256x1xf32> to vector<256x16xf32>
      %61 = vector.broadcast %59 : vector<1x16xf32> to vector<256x16xf32>
      %62 = arith.mulf %60, %61 : vector<256x16xf32>
      %63 = arith.addf %50, %62 : vector<256x16xf32>
      %64 = tpu.transpose %63, [1, 0] : vector<256x16xf32> -> vector<16x256xf32>
      %c0_25 = arith.constant 0 : index
      %c0_26 = arith.constant 0 : index
      %c0_27 = arith.constant 0 : index
      %65 = vector.load %arg7[%c0_25, %c0_26, %c0_27] : memref<1x16x256xf32, #tpu.memory_space<vmem>>, vector<1x16x256xf32>
      %66 = vector.shape_cast %65 : vector<1x16x256xf32> to vector<16x256xf32>
      %67 = vector.shape_cast %64 : vector<16x256xf32> to vector<1x16x256xf32>
      tpu.vector_store %arg7[%c0_25, %c0_26, %c0_27], %67 {strides = array<i32>} : memref<1x16x256xf32, #tpu.memory_space<vmem>>, vector<1x16x256xf32>,
    } else {
    }
    return
  }
  func.func @transform_0(%arg0: i32, %arg1: i32, %arg2: i32) -> (i32, i32) {
    %c0_i32 = arith.constant 0 : i32
    %c0_i32_0 = arith.constant 0 : i32
    return %arg1, %c0_i32 : i32, i32
  }
  func.func @transform_1(%arg0: i32, %arg1: i32, %arg2: i32) -> (i32, i32, i32, i32) {
    %c0_i32 = arith.constant 0 : i32
    %c0_i32_0 = arith.constant 0 : i32
    %c0_i32_1 = arith.constant 0 : i32
    %c0_i32_2 = arith.constant 0 : i32
    return %arg0, %c0_i32, %c0_i32_0, %c0_i32_1 : i32, i32, i32, i32
  }
  func.func @transform_2(%arg0: i32, %arg1: i32, %arg2: i32) -> (i32, i32, i32, i32) {
    %c0_i32 = arith.constant 0 : i32
    %c0_i32_0 = arith.constant 0 : i32
    %c0_i32_1 = arith.constant 0 : i32
    %c0_i32_2 = arith.constant 0 : i32
    return %arg0, %c0_i32, %c0_i32_0, %c0_i32_1 : i32, i32, i32, i32
  }
  func.func @transform_3(%arg0: i32, %arg1: i32, %arg2: i32) -> (i32, i32, i32) {
    %c0_i32 = arith.constant 0 : i32
    %c0_i32_0 = arith.constant 0 : i32
    %c0_i32_1 = arith.constant 0 : i32
    return %arg0, %c0_i32, %c0_i32_0 : i32, i32, i32
  }
  func.func @transform_4(%arg0: i32, %arg1: i32, %arg2: i32) -> (i32, i32, i32) {
    %c0_i32 = arith.constant 0 : i32
    %c0_i32_0 = arith.constant 0 : i32
    return %arg0, %c0_i32, %arg1 : i32, i32, i32
  }
}

</mosaic_0001>

<llo_original>
// kernel: tpu_custom_call.1
$region0: #{tpu_custom_call.1}
  #allocation0 [shape = 'u32[]', space=smem, size = 0x4, offset = 0x4, fixed_abs, tag = 'smem constant byte address 0x4 - core index']
  #allocation1 [shape = 'u32[144,128]{1,0:T(1,128)}', space=vmem, size = 0x12000, scoped, tag = 'internal scratch']
  #allocation2 [shape = 'f32[256,16]{1,0:T(8,128)}', space=vmem, size = 0x20000, scoped, tag = 'scratch operand']
  %s0 = inlined_call_operand.vmem [shape: f32[256,2], index: 0, kind: input, shape index: {}]
  %s1 = inlined_call_operand.vmem [shape: f32[4,2,8,256], index: 1, kind: input, shape index: {}]
  %s2 = inlined_call_operand.vmem [shape: bf16[4,2,256,16], index: 2, kind: input, shape index: {}]
  %s3 = inlined_call_operand.vmem [shape: f32[4,1,16], index: 3, kind: input, shape index: {}]
  %s4 = inlined_call_operand.hbm [shape: f32[4,16,256], index: 4, kind: output, shape index: {}]
  %s5 = sld [smem:[#allocation0]]
  $region57: #{tpu_custom_call.1} parent=0
    _
  %s7 = ssub.s32 1, %s5
  %s8 = scalar_select 0, %s7, %s5
  $region1: #{tpu_custom_call.1} parent=0
    #allocation3 [shape = 'u8[32768]{0}', space=vmem, size = 0x8000, scoped, tag = 'output window, operand 0']
    #allocation4 [shape = 's32[2]{0}', space=sflag, size = 0x8, scoped, tag = 'scoped memory for tpu_custom_call.1']
    %9 = vsyncpa [#allocation4], 0
    %s10 = scalar_lea.sflag [#allocation4], 1
    %11 = vsyncpa %s10, 0
    loop: start=0, step=1, limit=10
    $region2: #{tpu_custom_call.1} parent=1 // loop_pre_header
      _
    $region3: #{tpu_custom_call.1} parent=1 // loop_header
      %s13 = sphi 0, %s17
      %p14 = scmp.ge.s32.totalorder %s13, 10
      %s20 = sphi 0, %s39
      %s21 = sphi 0, %s35
      %s22 = sphi 0, %s31
      %s23 = sphi 0, %s20
      %s24 = sphi 0, %s21
      %s25 = sphi 0, %s22
      %s26 = sphi 0, %s23
      %s27 = sphi 0, %s24
      %s28 = sphi 0, %s25
      %s42 = sphi 0, %s44
      %s45 = sphi 0, %s42
      %s46 = sphi 0, %s45
      %s62 = sphi 0, %s46
      %s68 = sphi 0, %s70
      %s71 = sphi 0, %s68
      %s72 = sphi 0, %s71
      %s88 = sphi 0, %s72
      %s94 = sphi 0, %s96
      %s97 = sphi 0, %s94
      %s98 = sphi 0, %s97
      %s114 = sphi 0, %s98
      %s120 = sphi 0, %s122
      %s123 = sphi 0, %s120
      %s124 = sphi 0, %s123
      %s140 = sphi 0, %s124
      %s148 = sphi 0, %s150
      %s151 = sphi 0, %s148
      %s152 = sphi 0, %s151
      %s168 = sphi 0, %s152
    $region4: #{tpu_custom_call.1} parent=1 // loop_header_branch
      %16 = sbr.rel (%p14) target = $region8
    $region5: #{tpu_custom_call.1} parent=1 // loop_body
      %s18 = ssub.s32 %s13, 1
      %s19 = ssub.s32 %s13, 2
      %s29 = sadd.s32 1, %s22
      %p30 = scmp.ge.s32.totalorder %s29, 2
      %s31 = scalar_select %p30, 0, %s29
      %s32 = sadd.s32 1, %s21
      %s33 = scalar_select %p30, %s32, %s21
      %p34 = scmp.ge.s32.totalorder %s33, 1
      %s35 = scalar_select %p34, 0, %s33
      %s36 = sadd.s32 1, %s20
      %s37 = scalar_select %p34, %s36, %s20
      %p38 = scmp.ge.s32.totalorder %s37, 4
      %s39 = scalar_select %p38, 0, %s37
      %s40 = ssub.s32 %s21, %s35
      %p41 = scmp.eq.s32.totalorder %s40, 0
      %s43 = sadd.s32 %s42, 1
      %s44 = scalar_select %p41, %s42, %s43
      %p47 = pneg %p41
      %p48 = scmp.eq.s32.totalorder %s13, 7
      %p49 = por %p47, %p48
      %p50 = scmp.ne.s32.totalorder %s42, %s45
      %p51 = scmp.eq.s32.totalorder %s13, 0
      %p52 = por %p50, %p51
      %p53 = scmp.ne.s32.totalorder %s42, %s45
      %p54 = scmp.eq.s32.totalorder %s18, 7
      %p55 = por %p53, %p54
      %p56 = scmp.ne.s32.totalorder %s45, %s46
      %p57 = scmp.eq.s32.totalorder %s18, 0
      %p58 = por %p56, %p57
      %p59 = scmp.ne.s32.totalorder %s45, %s46
      %p60 = scmp.eq.s32.totalorder %s19, 7
      %p61 = por %p59, %p60
      %p63 = scmp.ne.s32.totalorder %s46, %s62
      %p64 = scmp.eq.s32.totalorder %s19, 0
      %p65 = por %p63, %p64
      %s66 = ssub.s32 %s20, %s39
      %p67 = scmp.eq.s32.totalorder %s66, 0
      %s69 = sadd.s32 %s68, 1
      %s70 = scalar_select %p67, %s68, %s69
      %p73 = pneg %p67
      %p74 = scmp.eq.s32.totalorder %s13, 7
      %p75 = por %p73, %p74
      %p76 = scmp.ne.s32.totalorder %s68, %s71
      %p77 = scmp.eq.s32.totalorder %s13, 0
      %p78 = por %p76, %p77
      %p79 = scmp.ne.s32.totalorder %s68, %s71
      %p80 = scmp.eq.s32.totalorder %s18, 7
      %p81 = por %p79, %p80
      %p82 = scmp.ne.s32.totalorder %s71, %s72
      %p83 = scmp.eq.s32.totalorder %s18, 0
      %p84 = por %p82, %p83
      %p85 = scmp.ne.s32.totalorder %s71, %s72
      %p86 = scmp.eq.s32.totalorder %s19, 7
      %p87 = por %p85, %p86
      %p89 = scmp.ne.s32.totalorder %s72, %s88
      %p90 = scmp.eq.s32.totalorder %s19, 0
      %p91 = por %p89, %p90
      %s92 = ssub.s32 %s20, %s39
      %p93 = scmp.eq.s32.totalorder %s92, 0
      %s95 = sadd.s32 %s94, 1
      %s96 = scalar_select %p93, %s94, %s95
      %p99 = pneg %p93
      %p100 = scmp.eq.s32.totalorder %s13, 7
      %p101 = por %p99, %p100
      %p102 = scmp.ne.s32.totalorder %s94, %s97
      %p103 = scmp.eq.s32.totalorder %s13, 0
      %p104 = por %p102, %p103
      %p105 = scmp.ne.s32.totalorder %s94, %s97
      %p106 = scmp.eq.s32.totalorder %s18, 7
      %p107 = por %p105, %p106
      %p108 = scmp.ne.s32.totalorder %s97, %s98
      %p109 = scmp.eq.s32.totalorder %s18, 0
      %p110 = por %p108, %p109
      %p111 = scmp.ne.s32.totalorder %s97, %s98
      %p112 = scmp.eq.s32.totalorder %s19, 7
      %p113 = por %p111, %p112
      %p115 = scmp.ne.s32.totalorder %s98, %s114
      %p116 = scmp.eq.s32.totalorder %s19, 0
      %p117 = por %p115, %p116
      %s118 = ssub.s32 %s20, %s39
      %p119 = scmp.eq.s32.totalorder %s118, 0
      %s121 = sadd.s32 %s120, 1
      %s122 = scalar_select %p119, %s120, %s121
      %p125 = pneg %p119
      %p126 = scmp.eq.s32.totalorder %s13, 7
      %p127 = por %p125, %p126
      %p128 = scmp.ne.s32.totalorder %s120, %s123
      %p129 = scmp.eq.s32.totalorder %s13, 0
      %p130 = por %p128, %p129
      %p131 = scmp.ne.s32.totalorder %s120, %s123
      %p132 = scmp.eq.s32.totalorder %s18, 7
      %p133 = por %p131, %p132
      %p134 = scmp.ne.s32.totalorder %s123, %s124
      %p135 = scmp.eq.s32.totalorder %s18, 0
      %p136 = por %p134, %p135
      %p137 = scmp.ne.s32.totalorder %s123, %s124
      %p138 = scmp.eq.s32.totalorder %s19, 7
      %p139 = por %p137, %p138
      %p141 = scmp.ne.s32.totalorder %s124, %s140
      %p142 = scmp.eq.s32.totalorder %s19, 0
      %p143 = por %p141, %p142
      %s144 = ssub.s32 %s20, %s39
      %s145 = ssub.s32 %s21, %s35
      %s146 = sor.u32 %s144, %s145
      %p147 = scmp.eq.s32.totalorder %s146, 0
      %s149 = sadd.s32 %s148, 1
      %s150 = scalar_select %p147, %s148, %s149
      %p153 = pneg %p147
      %p154 = scmp.eq.s32.totalorder %s13, 7
      %p155 = por %p153, %p154
      %p156 = scmp.ne.s32.totalorder %s148, %s151
      %p157 = scmp.eq.s32.totalorder %s13, 0
      %p158 = por %p156, %p157
      %p159 = scmp.ne.s32.totalorder %s148, %s151
      %p160 = scmp.eq.s32.totalorder %s18, 7
      %p161 = por %p159, %p160
      %p162 = scmp.ne.s32.totalorder %s151, %s152
      %p163 = scmp.eq.s32.totalorder %s18, 0
      %p164 = por %p162, %p163
      %p165 = scmp.ne.s32.totalorder %s151, %s152
      %p166 = scmp.eq.s32.totalorder %s19, 7
      %p167 = por %p165, %p166
      %p169 = scmp.ne.s32.totalorder %s152, %s168
      %p170 = scmp.eq.s32.totalorder %s19, 0
      %p171 = por %p169, %p170
      %p172 = scmp.le.s32.totalorder 1, %s13
      %p173 = scmp.lt.s32.totalorder %s13, 9
      %p174 = pnand %p172, %p173
      %p175 = pneg %p174
      // Predicated region
      $region9: #{tpu_custom_call.1} parent=5 // pred_check
        _
      $region10: #{tpu_custom_call.1} parent=5 // pred_check_branch
        %177 = sbr.rel (%p174) target = $region12
      $region11: #{tpu_custom_call.1} parent=5 // pred_region
        %s178 = ssub.s32 %s13, 1
        // Predicated region
        $region13: #{tpu_custom_call.1} parent=11 // pred_check
          %p179 = pneg %p58
        $region14: #{tpu_custom_call.1} parent=11 // pred_check_branch
          %181 = sbr.rel (%p179) target = $region16
        $region15: #{tpu_custom_call.1} parent=11 // pred_region
          %s182 = smul.u32 32, %s24
          %p183 = scmp.lt.s32.totalorder %s182, 31
          %s184 = scalar_select %p183, %s182, 31
          %s185 = smul.addr %s184, 8
          %s186 = scalar_lea.vmem %s0, %s185
          %s187 = smul.u32 32, %s24
        $region16: #{tpu_custom_call.1} parent=11 // pred_fallthru
          _
      $region12: #{tpu_custom_call.1} parent=5 // pred_fallthru
        _
      %p188 = scmp.lt.s32.totalorder %s13, 8
      // Predicated region
      $region17: #{tpu_custom_call.1} parent=5 // pred_check
        %p189 = pneg %p188
      $region18: #{tpu_custom_call.1} parent=5 // pred_check_branch
        %191 = sbr.rel (%p189) target = $region20
      $region19: #{tpu_custom_call.1} parent=5 // pred_region
        // Predicated region
        $region21: #{tpu_custom_call.1} parent=19 // pred_check
          %p192 = pneg %p78
        $region22: #{tpu_custom_call.1} parent=19 // pred_check_branch
          %194 = sbr.rel (%p192) target = $region24
        $region23: #{tpu_custom_call.1} parent=19 // pred_region
          %p195 = scmp.lt.s32.totalorder %s20, 3
          %s196 = scalar_select %p195, %s20, 3
          %s197 = smul.addr %s196, 4
          %s198 = smul.addr %s197, 8
          %s199 = scalar_lea.vmem %s1, %s198
        $region24: #{tpu_custom_call.1} parent=19 // pred_fallthru
          _
        // Predicated region
        $region25: #{tpu_custom_call.1} parent=19 // pred_check
          %p200 = pneg %p104
        $region26: #{tpu_custom_call.1} parent=19 // pred_check_branch
          %202 = sbr.rel (%p200) target = $region28
        $region27: #{tpu_custom_call.1} parent=19 // pred_region
          %p203 = scmp.lt.s32.totalorder %s20, 3
          %s204 = scalar_select %p203, %s20, 3
          %s205 = smul.addr %s204, 64
          %s206 = smul.addr %s205, 4
          %s207 = scalar_lea.vmem %s2, %s206
        $region28: #{tpu_custom_call.1} parent=19 // pred_fallthru
          _
        // Predicated region
        $region29: #{tpu_custom_call.1} parent=19 // pred_check
          %p208 = pneg %p130
        $region30: #{tpu_custom_call.1} parent=19 // pred_check_branch
          %210 = sbr.rel (%p208) target = $region32
        $region31: #{tpu_custom_call.1} parent=19 // pred_region
          %p211 = scmp.lt.s32.totalorder %s20, 3
          %s212 = scalar_select %p211, %s20, 3
          %s213 = scalar_lea.vmem %s3, %s212
        $region32: #{tpu_custom_call.1} parent=19 // pred_fallthru
          _
      $region20: #{tpu_custom_call.1} parent=5 // pred_fallthru
        _
      %p214 = scmp.le.s32.totalorder 1, %s13
      %p215 = scmp.lt.s32.totalorder %s13, 9
      %p216 = pnand %p214, %p215
      %p217 = pneg %p216
      // Predicated region
      $region33: #{tpu_custom_call.1} parent=5 // pred_check
        _
      $region34: #{tpu_custom_call.1} parent=5 // pred_check_branch
        %219 = sbr.rel (%p216) target = $region36
      $region35: #{tpu_custom_call.1} parent=5 // pred_region
        %s220 = ssub.s32 %s13, 1
        %s221 = smul.u32 32, %s24
        %p222 = scmp.lt.s32.totalorder %s221, 31
        %s223 = scalar_select %p222, %s221, 31
        %s224 = smul.addr %s223, 8
        %s225 = scalar_lea.vmem %s0, %s224
        %p226 = pneg %p58
        %p227 = pneg %p55
        %p228 = scmp.lt.s32.totalorder %s23, 3
        %s229 = scalar_select %p228, %s23, 3
        %s230 = smul.addr %s229, 4
        %s231 = smul.addr %s230, 8
        %s232 = scalar_lea.vmem %s1, %s231
        %p233 = pneg %p84
        %p234 = pneg %p81
        %p235 = scmp.lt.s32.totalorder %s23, 3
        %s236 = scalar_select %p235, %s23, 3
        %s237 = smul.addr %s236, 64
        %s238 = smul.addr %s237, 4
        %s239 = scalar_lea.vmem %s2, %s238
        %p240 = pneg %p110
        %p241 = pneg %p107
        %p242 = scmp.lt.s32.totalorder %s23, 3
        %s243 = scalar_select %p242, %s23, 3
        %s244 = scalar_lea.vmem %s3, %s243
        %p245 = pneg %p136
        %p246 = pneg %p133
        %p247 = pneg %p164
        %p248 = pneg %p161
        %s249 = sand.u32 %s151, 1
        %s250 = scalar_lea.sflag [#allocation4], %s249
        %s251 = sand.u32 %s151, 1
        %s252 = smul.addr %s251, 32
        %s253 = scalar_lea.vmem [#allocation3], %s252
        %s254 = smul.u32 32, %s24
        %p255 = scmp.lt.s32.totalorder %s254, 31
        %s256 = scalar_select %p255, %s254, 31
        %s257 = smul.addr %s256, 8
        %s258 = scalar_lea.vmem %s0, %s257
        %s259 = smul.u32 32, %s24
        %p260 = scmp.lt.s32.totalorder %s23, 3
        %s261 = scalar_select %p260, %s23, 3
        %s262 = smul.addr %s261, 4
        %s263 = smul.addr %s262, 8
        %s264 = scalar_lea.vmem %s1, %s263
        %p265 = scmp.lt.s32.totalorder %s23, 3
        %s266 = scalar_select %p265, %s23, 3
        %s267 = smul.addr %s266, 64
        %s268 = smul.addr %s267, 4
        %s269 = scalar_lea.vmem %s2, %s268
        %p270 = scmp.lt.s32.totalorder %s23, 3
        %s271 = scalar_select %p270, %s23, 3
        %s272 = scalar_lea.vmem %s3, %s271
        %s273 = smul.u32 2, %s24
        %p275 = scmp.eq.s32.totalorder %s25, 0
        // Predicated region
        $region37: #{tpu_custom_call.1} parent=35 // pred_check
          %p276 = pneg %p275
        $region38: #{tpu_custom_call.1} parent=35 // pred_check_branch
          %278 = sbr.rel (%p276) target = $region40
        $region39: #{tpu_custom_call.1} parent=35 // pred_region
          %vm279 = vcmask 130048
          %280 = vst.msk [vmem:[#allocation2] sm:$0xff] %vm279, 0.0
          %281 = vst.msk [vmem:[#allocation2 + $0x8] sm:$0xff] %vm279, 0.0
          %282 = vst.msk [vmem:[#allocation2 + $0x10] sm:$0xff] %vm279, 0.0
          %283 = vst.msk [vmem:[#allocation2 + $0x18] sm:$0xff] %vm279, 0.0
          %284 = vst.msk [vmem:[#allocation2 + $0x20] sm:$0xff] %vm279, 0.0
          %285 = vst.msk [vmem:[#allocation2 + $0x28] sm:$0xff] %vm279, 0.0
          %286 = vst.msk [vmem:[#allocation2 + $0x30] sm:$0xff] %vm279, 0.0
          %287 = vst.msk [vmem:[#allocation2 + $0x38] sm:$0xff] %vm279, 0.0
          %288 = vst.msk [vmem:[#allocation2 + $0x40] sm:$0xff] %vm279, 0.0
          %289 = vst.msk [vmem:[#allocation2 + $0x48] sm:$0xff] %vm279, 0.0
          %290 = vst.msk [vmem:[#allocation2 + $0x50] sm:$0xff] %vm279, 0.0
          %291 = vst.msk [vmem:[#allocation2 + $0x58] sm:$0xff] %vm279, 0.0
          %292 = vst.msk [vmem:[#allocation2 + $0x60] sm:$0xff] %vm279, 0.0
          %293 = vst.msk [vmem:[#allocation2 + $0x68] sm:$0xff] %vm279, 0.0
          %294 = vst.msk [vmem:[#allocation2 + $0x70] sm:$0xff] %vm279, 0.0
          %295 = vst.msk [vmem:[#allocation2 + $0x78] sm:$0xff] %vm279, 0.0
          %296 = vst.msk [vmem:[#allocation2 + $0x80] sm:$0xff] %vm279, 0.0
          %297 = vst.msk [vmem:[#allocation2 + $0x88] sm:$0xff] %vm279, 0.0
          %298 = vst.msk [vmem:[#allocation2 + $0x90] sm:$0xff] %vm279, 0.0
          %299 = vst.msk [vmem:[#allocation2 + $0x98] sm:$0xff] %vm279, 0.0
          %300 = vst.msk [vmem:[#allocation2 + $0xa0] sm:$0xff] %vm279, 0.0
          %301 = vst.msk [vmem:[#allocation2 + $0xa8] sm:$0xff] %vm279, 0.0
          %302 = vst.msk [vmem:[#allocation2 + $0xb0] sm:$0xff] %vm279, 0.0
          %303 = vst.msk [vmem:[#allocation2 + $0xb8] sm:$0xff] %vm279, 0.0
          %304 = vst.msk [vmem:[#allocation2 + $0xc0] sm:$0xff] %vm279, 0.0
          %305 = vst.msk [vmem:[#allocation2 + $0xc8] sm:$0xff] %vm279, 0.0
          %306 = vst.msk [vmem:[#allocation2 + $0xd0] sm:$0xff] %vm279, 0.0
          %307 = vst.msk [vmem:[#allocation2 + $0xd8] sm:$0xff] %vm279, 0.0
          %308 = vst.msk [vmem:[#allocation2 + $0xe0] sm:$0xff] %vm279, 0.0
          %309 = vst.msk [vmem:[#allocation2 + $0xe8] sm:$0xff] %vm279, 0.0
          %310 = vst.msk [vmem:[#allocation2 + $0xf0] sm:$0xff] %vm279, 0.0
          %311 = vst.msk [vmem:[#allocation2 + $0xf8] sm:$0xff] %vm279, 0.0
        $region40: #{tpu_custom_call.1} parent=35 // pred_fallthru
          _
        %s312 = smul.u32 %s25, 2
        %s313 = smul.addr %s312, 8
        %s314 = scalar_lea.vmem %s264, %s313
        %v315 = vld [vmem:[%s314] sm:$0xff]
        %v316 = vld [vmem:[%s314 + $0x8] sm:$0xff]
        %s317 = smul.u32 %s25, 32
        %s318 = smul.addr %s317, 4
        %s319 = scalar_lea.vmem %s269, %s318
        %v320 = vld [vmem:[%s319] sm:$0xf]
        %v321 = vld [vmem:[%s319 + $0x4] sm:$0xf]
        %v322 = vld [vmem:[%s319 + $0x8] sm:$0xf]
        %v323 = vld [vmem:[%s319 + $0xc] sm:$0xf]
        %v324 = vld [vmem:[%s319 + $0x10] sm:$0xf]
        %v325 = vld [vmem:[%s319 + $0x14] sm:$0xf]
        %v326 = vld [vmem:[%s319 + $0x18] sm:$0xf]
        %v327 = vld [vmem:[%s319 + $0x1c] sm:$0xf]
        %v328 = vld [vmem:[%s319 + $0x20] sm:$0xf]
        %v329 = vld [vmem:[%s319 + $0x24] sm:$0xf]
        %v330 = vld [vmem:[%s319 + $0x28] sm:$0xf]
        %v331 = vld [vmem:[%s319 + $0x2c] sm:$0xf]
        %v332 = vld [vmem:[%s319 + $0x30] sm:$0xf]
        %v333 = vld [vmem:[%s319 + $0x34] sm:$0xf]
        %v334 = vld [vmem:[%s319 + $0x38] sm:$0xf]
        %v335 = vld [vmem:[%s319 + $0x3c] sm:$0xf]
        %v336 = vld [vmem:[%s319 + $0x40] sm:$0xf]
        %v337 = vld [vmem:[%s319 + $0x44] sm:$0xf]
        %v338 = vld [vmem:[%s319 + $0x48] sm:$0xf]
        %v339 = vld [vmem:[%s319 + $0x4c] sm:$0xf]
        %v340 = vld [vmem:[%s319 + $0x50] sm:$0xf]
        %v341 = vld [vmem:[%s319 + $0x54] sm:$0xf]
        %v342 = vld [vmem:[%s319 + $0x58] sm:$0xf]
        %v343 = vld [vmem:[%s319 + $0x5c] sm:$0xf]
        %v344 = vld [vmem:[%s319 + $0x60] sm:$0xf]
        %v345 = vld [vmem:[%s319 + $0x64] sm:$0xf]
        %v346 = vld [vmem:[%s319 + $0x68] sm:$0xf]
        %v347 = vld [vmem:[%s319 + $0x6c] sm:$0xf]
        %v348 = vld [vmem:[%s319 + $0x70] sm:$0xf]
        %v349 = vld [vmem:[%s319 + $0x74] sm:$0xf]
        %v350 = vld [vmem:[%s319 + $0x78] sm:$0xf]
        %v351 = vld [vmem:[%s319 + $0x7c] sm:$0xf]
        %v352 = vld [vmem:[%s258] sm:$0xff]
        %v353 = vld [vmem:[%s258 + $0x8] sm:$0xff]
        %v354 = vld [vmem:[%s258 + $0x10] sm:$0xff]
        %v355 = vld [vmem:[%s258 + $0x18] sm:$0xff]
        %v356 = vld [vmem:[%s258 + $0x20] sm:$0xff]
        %v357 = vld [vmem:[%s258 + $0x28] sm:$0xff]
        %v358 = vld [vmem:[%s258 + $0x30] sm:$0xff]
        %v359 = vld [vmem:[%s258 + $0x38] sm:$0xff]
        %v360 = vld [vmem:[%s258 + $0x40] sm:$0xff]
        %v361 = vld [vmem:[%s258 + $0x48] sm:$0xff]
        %v362 = vld [vmem:[%s258 + $0x50] sm:$0xff]
        %v363 = vld [vmem:[%s258 + $0x58] sm:$0xff]
        %v364 = vld [vmem:[%s258 + $0x60] sm:$0xff]
        %v365 = vld [vmem:[%s258 + $0x68] sm:$0xff]
        %v366 = vld [vmem:[%s258 + $0x70] sm:$0xff]
        %v367 = vld [vmem:[%s258 + $0x78] sm:$0xff]
        %v368 = vld [vmem:[%s258 + $0x80] sm:$0xff]
        %v369 = vld [vmem:[%s258 + $0x88] sm:$0xff]
        %v370 = vld [vmem:[%s258 + $0x90] sm:$0xff]
        %v371 = vld [vmem:[%s258 + $0x98] sm:$0xff]
        %v372 = vld [vmem:[%s258 + $0xa0] sm:$0xff]
        %v373 = vld [vmem:[%s258 + $0xa8] sm:$0xff]
        %v374 = vld [vmem:[%s258 + $0xb0] sm:$0xff]
        %v375 = vld [vmem:[%s258 + $0xb8] sm:$0xff]
        %v376 = vld [vmem:[%s258 + $0xc0] sm:$0xff]
        %v377 = vld [vmem:[%s258 + $0xc8] sm:$0xff]
        %v378 = vld [vmem:[%s258 + $0xd0] sm:$0xff]
        %v379 = vld [vmem:[%s258 + $0xd8] sm:$0xff]
        %v380 = vld [vmem:[%s258 + $0xe0] sm:$0xff]
        %v381 = vld [vmem:[%s258 + $0xe8] sm:$0xff]
        %v382 = vld [vmem:[%s258 + $0xf0] sm:$0xff]
        %v383 = vld [vmem:[%s258 + $0xf8] sm:$0xff]
        %385 = vset.pattern.permute.xlu0 0
        %386 = vperm.xlu0 %385, %v352
        %v387 = vpop.permute.xlu0 %386
        %390 = vset.pattern.permute.xlu0 0
        %391 = vperm.xlu0 %390, %v353
        %v392 = vpop.permute.xlu0 %391
        %395 = vset.pattern.permute.xlu0 0
        %396 = vperm.xlu0 %395, %v354
        %v397 = vpop.permute.xlu0 %396
        %400 = vset.pattern.permute.xlu0 0
        %401 = vperm.xlu0 %400, %v355
        %v402 = vpop.permute.xlu0 %401
        %405 = vset.pattern.permute.xlu0 0
        %406 = vperm.xlu0 %405, %v356
        %v407 = vpop.permute.xlu0 %406
        %410 = vset.pattern.permute.xlu0 0
        %411 = vperm.xlu0 %410, %v357
        %v412 = vpop.permute.xlu0 %411
        %415 = vset.pattern.permute.xlu0 0
        %416 = vperm.xlu0 %415, %v358
        %v417 = vpop.permute.xlu0 %416
        %420 = vset.pattern.permute.xlu0 0
        %421 = vperm.xlu0 %420, %v359
        %v422 = vpop.permute.xlu0 %421
        %425 = vset.pattern.permute.xlu0 0
        %426 = vperm.xlu0 %425, %v360
        %v427 = vpop.permute.xlu0 %426
        %430 = vset.pattern.permute.xlu0 0
        %431 = vperm.xlu0 %430, %v361
        %v432 = vpop.permute.xlu0 %431
        %435 = vset.pattern.permute.xlu0 0
        %436 = vperm.xlu0 %435, %v362
        %v437 = vpop.permute.xlu0 %436
        %440 = vset.pattern.permute.xlu0 0
        %441 = vperm.xlu0 %440, %v363
        %v442 = vpop.permute.xlu0 %441
        %445 = vset.pattern.permute.xlu0 0
        %446 = vperm.xlu0 %445, %v364
        %v447 = vpop.permute.xlu0 %446
        %450 = vset.pattern.permute.xlu0 0
        %451 = vperm.xlu0 %450, %v365
        %v452 = vpop.permute.xlu0 %451
        %455 = vset.pattern.permute.xlu0 0
        %456 = vperm.xlu0 %455, %v366
        %v457 = vpop.permute.xlu0 %456
        %460 = vset.pattern.permute.xlu0 0
        %461 = vperm.xlu0 %460, %v367
        %v462 = vpop.permute.xlu0 %461
        %465 = vset.pattern.permute.xlu0 0
        %466 = vperm.xlu0 %465, %v368
        %v467 = vpop.permute.xlu0 %466
        %470 = vset.pattern.permute.xlu0 0
        %471 = vperm.xlu0 %470, %v369
        %v472 = vpop.permute.xlu0 %471
        %475 = vset.pattern.permute.xlu0 0
        %476 = vperm.xlu0 %475, %v370
        %v477 = vpop.permute.xlu0 %476
        %480 = vset.pattern.permute.xlu0 0
        %481 = vperm.xlu0 %480, %v371
        %v482 = vpop.permute.xlu0 %481
        %485 = vset.pattern.permute.xlu0 0
        %486 = vperm.xlu0 %485, %v372
        %v487 = vpop.permute.xlu0 %486
        %490 = vset.pattern.permute.xlu0 0
        %491 = vperm.xlu0 %490, %v373
        %v492 = vpop.permute.xlu0 %491
        %495 = vset.pattern.permute.xlu0 0
        %496 = vperm.xlu0 %495, %v374
        %v497 = vpop.permute.xlu0 %496
        %500 = vset.pattern.permute.xlu0 0
        %501 = vperm.xlu0 %500, %v375
        %v502 = vpop.permute.xlu0 %501
        %505 = vset.pattern.permute.xlu0 0
        %506 = vperm.xlu0 %505, %v376
        %v507 = vpop.permute.xlu0 %506
        %510 = vset.pattern.permute.xlu0 0
        %511 = vperm.xlu0 %510, %v377
        %v512 = vpop.permute.xlu0 %511
        %515 = vset.pattern.permute.xlu0 0
        %516 = vperm.xlu0 %515, %v378
        %v517 = vpop.permute.xlu0 %516
        %520 = vset.pattern.permute.xlu0 0
        %521 = vperm.xlu0 %520, %v379
        %v522 = vpop.permute.xlu0 %521
        %525 = vset.pattern.permute.xlu0 0
        %526 = vperm.xlu0 %525, %v380
        %v527 = vpop.permute.xlu0 %526
        %530 = vset.pattern.permute.xlu0 0
        %531 = vperm.xlu0 %530, %v381
        %v532 = vpop.permute.xlu0 %531
        %535 = vset.pattern.permute.xlu0 0
        %536 = vperm.xlu0 %535, %v382
        %v537 = vpop.permute.xlu0 %536
        %540 = vset.pattern.permute.xlu0 0
        %541 = vperm.xlu0 %540, %v383
        %v542 = vpop.permute.xlu0 %541
        %v544 = vlaneseq
        %v545 = vshrl.u32 %v544, 7
        %v546 = vsub.s32 0, %v545
        %v547 = vrot.slane %v315, %v546
        %v548 = vlaneseq
        %v549 = vshrl.u32 %v548, 7
        %v550 = vsub.s32 0, %v549
        %v551 = vrot.slane %v316, %v550
        %v552 = vsub.f32 %v387, %v547
        %v553 = vsub.f32 %v387, %v551
        %v554 = vsub.f32 %v392, %v547
        %v555 = vsub.f32 %v392, %v551
        %v556 = vsub.f32 %v397, %v547
        %v557 = vsub.f32 %v397, %v551
        %v558 = vsub.f32 %v402, %v547
        %v559 = vsub.f32 %v402, %v551
        %v560 = vsub.f32 %v407, %v547
        %v561 = vsub.f32 %v407, %v551
        %v562 = vsub.f32 %v412, %v547
        %v563 = vsub.f32 %v412, %v551
        %v564 = vsub.f32 %v417, %v547
        %v565 = vsub.f32 %v417, %v551
        %v566 = vsub.f32 %v422, %v547
        %v567 = vsub.f32 %v422, %v551
        %v568 = vsub.f32 %v427, %v547
        %v569 = vsub.f32 %v427, %v551
        %v570 = vsub.f32 %v432, %v547
        %v571 = vsub.f32 %v432, %v551
        %v572 = vsub.f32 %v437, %v547
        %v573 = vsub.f32 %v437, %v551
        %v574 = vsub.f32 %v442, %v547
        %v575 = vsub.f32 %v442, %v551
        %v576 = vsub.f32 %v447, %v547
        %v577 = vsub.f32 %v447, %v551
        %v578 = vsub.f32 %v452, %v547
        %v579 = vsub.f32 %v452, %v551
        %v580 = vsub.f32 %v457, %v547
        %v581 = vsub.f32 %v457, %v551
        %v582 = vsub.f32 %v462, %v547
        %v583 = vsub.f32 %v462, %v551
        %v584 = vsub.f32 %v467, %v547
        %v585 = vsub.f32 %v467, %v551
        %v586 = vsub.f32 %v472, %v547
        %v587 = vsub.f32 %v472, %v551
        %v588 = vsub.f32 %v477, %v547
        %v589 = vsub.f32 %v477, %v551
        %v590 = vsub.f32 %v482, %v547
        %v591 = vsub.f32 %v482, %v551
        %v592 = vsub.f32 %v487, %v547
        %v593 = vsub.f32 %v487, %v551
        %v594 = vsub.f32 %v492, %v547
        %v595 = vsub.f32 %v492, %v551
        %v596 = vsub.f32 %v497, %v547
        %v597 = vsub.f32 %v497, %v551
        %v598 = vsub.f32 %v502, %v547
        %v599 = vsub.f32 %v502, %v551
        %v600 = vsub.f32 %v507, %v547
        %v601 = vsub.f32 %v507, %v551
        %v602 = vsub.f32 %v512, %v547
        %v603 = vsub.f32 %v512, %v551
        %v604 = vsub.f32 %v517, %v547
        %v605 = vsub.f32 %v517, %v551
        %v606 = vsub.f32 %v522, %v547
        %v607 = vsub.f32 %v522, %v551
        %v608 = vsub.f32 %v527, %v547
        %v609 = vsub.f32 %v527, %v551
        %v610 = vsub.f32 %v532, %v547
        %v611 = vsub.f32 %v532, %v551
        %v612 = vsub.f32 %v537, %v547
        %v613 = vsub.f32 %v537, %v551
        %v614 = vsub.f32 %v542, %v547
        %v615 = vsub.f32 %v542, %v551
        %616 = vset.pattern.permute.xlu0 1
        %617 = vperm.xlu0 %616, %v352
        %v618 = vpop.permute.xlu0 %617
        %620 = vset.pattern.permute.xlu0 1
        %621 = vperm.xlu0 %620, %v353
        %v622 = vpop.permute.xlu0 %621
        %624 = vset.pattern.permute.xlu0 1
        %625 = vperm.xlu0 %624, %v354
        %v626 = vpop.permute.xlu0 %625
        %628 = vset.pattern.permute.xlu0 1
        %629 = vperm.xlu0 %628, %v355
        %v630 = vpop.permute.xlu0 %629
        %632 = vset.pattern.permute.xlu0 1
        %633 = vperm.xlu0 %632, %v356
        %v634 = vpop.permute.xlu0 %633
        %636 = vset.pattern.permute.xlu0 1
        %637 = vperm.xlu0 %636, %v357
        %v638 = vpop.permute.xlu0 %637
        %640 = vset.pattern.permute.xlu0 1
        %641 = vperm.xlu0 %640, %v358
        %v642 = vpop.permute.xlu0 %641
        %644 = vset.pattern.permute.xlu0 1
        %645 = vperm.xlu0 %644, %v359
        %v646 = vpop.permute.xlu0 %645
        %648 = vset.pattern.permute.xlu0 1
        %649 = vperm.xlu0 %648, %v360
        %v650 = vpop.permute.xlu0 %649
        %652 = vset.pattern.permute.xlu0 1
        %653 = vperm.xlu0 %652, %v361
        %v654 = vpop.permute.xlu0 %653
        %656 = vset.pattern.permute.xlu0 1
        %657 = vperm.xlu0 %656, %v362
        %v658 = vpop.permute.xlu0 %657
        %660 = vset.pattern.permute.xlu0 1
        %661 = vperm.xlu0 %660, %v363
        %v662 = vpop.permute.xlu0 %661
        %664 = vset.pattern.permute.xlu0 1
        %665 = vperm.xlu0 %664, %v364
        %v666 = vpop.permute.xlu0 %665
        %668 = vset.pattern.permute.xlu0 1
        %669 = vperm.xlu0 %668, %v365
        %v670 = vpop.permute.xlu0 %669
        %672 = vset.pattern.permute.xlu0 1
        %673 = vperm.xlu0 %672, %v366
        %v674 = vpop.permute.xlu0 %673
        %676 = vset.pattern.permute.xlu0 1
        %677 = vperm.xlu0 %676, %v367
        %v678 = vpop.permute.xlu0 %677
        %680 = vset.pattern.permute.xlu0 1
        %681 = vperm.xlu0 %680, %v368
        %v682 = vpop.permute.xlu0 %681
        %684 = vset.pattern.permute.xlu0 1
        %685 = vperm.xlu0 %684, %v369
        %v686 = vpop.permute.xlu0 %685
        %688 = vset.pattern.permute.xlu0 1
        %689 = vperm.xlu0 %688, %v370
        %v690 = vpop.permute.xlu0 %689
        %692 = vset.pattern.permute.xlu0 1
        %693 = vperm.xlu0 %692, %v371
        %v694 = vpop.permute.xlu0 %693
        %696 = vset.pattern.permute.xlu0 1
        %697 = vperm.xlu0 %696, %v372
        %v698 = vpop.permute.xlu0 %697
        %700 = vset.pattern.permute.xlu0 1
        %701 = vperm.xlu0 %700, %v373
        %v702 = vpop.permute.xlu0 %701
        %704 = vset.pattern.permute.xlu0 1
        %705 = vperm.xlu0 %704, %v374
        %v706 = vpop.permute.xlu0 %705
        %708 = vset.pattern.permute.xlu0 1
        %709 = vperm.xlu0 %708, %v375
        %v710 = vpop.permute.xlu0 %709
        %712 = vset.pattern.permute.xlu0 1
        %713 = vperm.xlu0 %712, %v376
        %v714 = vpop.permute.xlu0 %713
        %716 = vset.pattern.permute.xlu0 1
        %717 = vperm.xlu0 %716, %v377
        %v718 = vpop.permute.xlu0 %717
        %720 = vset.pattern.permute.xlu0 1
        %721 = vperm.xlu0 %720, %v378
        %v722 = vpop.permute.xlu0 %721
        %724 = vset.pattern.permute.xlu0 1
        %725 = vperm.xlu0 %724, %v379
        %v726 = vpop.permute.xlu0 %725
        %728 = vset.pattern.permute.xlu0 1
        %729 = vperm.xlu0 %728, %v380
        %v730 = vpop.permute.xlu0 %729
        %732 = vset.pattern.permute.xlu0 1
        %733 = vperm.xlu0 %732, %v381
        %v734 = vpop.permute.xlu0 %733
        %736 = vset.pattern.permute.xlu0 1
        %737 = vperm.xlu0 %736, %v382
        %v738 = vpop.permute.xlu0 %737
        %740 = vset.pattern.permute.xlu0 1
        %741 = vperm.xlu0 %740, %v383
        %v742 = vpop.permute.xlu0 %741
        %v744 = vlaneseq
        %v745 = vshrl.u32 %v744, 7
        %v746 = vsub.s32 1, %v745
        %v747 = vrot.slane %v315, %v746
        %v748 = vlaneseq
        %v749 = vshrl.u32 %v748, 7
        %v750 = vsub.s32 1, %v749
        %v751 = vrot.slane %v316, %v750
        %v752 = vsub.f32 %v618, %v747
        %v753 = vsub.f32 %v618, %v751
        %v754 = vsub.f32 %v622, %v747
        %v755 = vsub.f32 %v622, %v751
        %v756 = vsub.f32 %v626, %v747
        %v757 = vsub.f32 %v626, %v751
        %v758 = vsub.f32 %v630, %v747
        %v759 = vsub.f32 %v630, %v751
        %v760 = vsub.f32 %v634, %v747
        %v761 = vsub.f32 %v634, %v751
        %v762 = vsub.f32 %v638, %v747
        %v763 = vsub.f32 %v638, %v751
        %v764 = vsub.f32 %v642, %v747
        %v765 = vsub.f32 %v642, %v751
        %v766 = vsub.f32 %v646, %v747
        %v767 = vsub.f32 %v646, %v751
        %v768 = vsub.f32 %v650, %v747
        %v769 = vsub.f32 %v650, %v751
        %v770 = vsub.f32 %v654, %v747
        %v771 = vsub.f32 %v654, %v751
        %v772 = vsub.f32 %v658, %v747
        %v773 = vsub.f32 %v658, %v751
        %v774 = vsub.f32 %v662, %v747
        %v775 = vsub.f32 %v662, %v751
        %v776 = vsub.f32 %v666, %v747
        %v777 = vsub.f32 %v666, %v751
        %v778 = vsub.f32 %v670, %v747
        %v779 = vsub.f32 %v670, %v751
        %v780 = vsub.f32 %v674, %v747
        %v781 = vsub.f32 %v674, %v751
        %v782 = vsub.f32 %v678, %v747
        %v783 = vsub.f32 %v678, %v751
        %v784 = vsub.f32 %v682, %v747
        %v785 = vsub.f32 %v682, %v751
        %v786 = vsub.f32 %v686, %v747
        %v787 = vsub.f32 %v686, %v751
        %v788 = vsub.f32 %v690, %v747
        %v789 = vsub.f32 %v690, %v751
        %v790 = vsub.f32 %v694, %v747
        %v791 = vsub.f32 %v694, %v751
        %v792 = vsub.f32 %v698, %v747
        %v793 = vsub.f32 %v698, %v751
        %v794 = vsub.f32 %v702, %v747
        %v795 = vsub.f32 %v702, %v751
        %v796 = vsub.f32 %v706, %v747
        %v797 = vsub.f32 %v706, %v751
        %v798 = vsub.f32 %v710, %v747
        %v799 = vsub.f32 %v710, %v751
        %v800 = vsub.f32 %v714, %v747
        %v801 = vsub.f32 %v714, %v751
        %v802 = vsub.f32 %v718, %v747
        %v803 = vsub.f32 %v718, %v751
        %v804 = vsub.f32 %v722, %v747
        %v805 = vsub.f32 %v722, %v751
        %v806 = vsub.f32 %v726, %v747
        %v807 = vsub.f32 %v726, %v751
        %v808 = vsub.f32 %v730, %v747
        %v809 = vsub.f32 %v730, %v751
        %v810 = vsub.f32 %v734, %v747
        %v811 = vsub.f32 %v734, %v751
        %v812 = vsub.f32 %v738, %v747
        %v813 = vsub.f32 %v738, %v751
        %v814 = vsub.f32 %v742, %v747
        %v815 = vsub.f32 %v742, %v751
        %v816 = vlaneseq
        %v817 = vshrl.u32 %v816, 7
        %v818 = vsub.s32 2, %v817
        %v819 = vrot.slane %v315, %v818
        %v820 = vlaneseq
        %v821 = vshrl.u32 %v820, 7
        %v822 = vsub.s32 2, %v821
        %v823 = vrot.slane %v316, %v822
        %v824 = vmul.f32 %v819, %v552
        %v825 = vmul.f32 %v823, %v553
        %v826 = vmul.f32 %v819, %v554
        %v827 = vmul.f32 %v823, %v555
        %v828 = vmul.f32 %v819, %v556
        %v829 = vmul.f32 %v823, %v557
        %v830 = vmul.f32 %v819, %v558
        %v831 = vmul.f32 %v823, %v559
        %v832 = vmul.f32 %v819, %v560
        %v833 = vmul.f32 %v823, %v561
        %v834 = vmul.f32 %v819, %v562
        %v835 = vmul.f32 %v823, %v563
        %v836 = vmul.f32 %v819, %v564
        %v837 = vmul.f32 %v823, %v565
        %v838 = vmul.f32 %v819, %v566
        %v839 = vmul.f32 %v823, %v567
        %v840 = vmul.f32 %v819, %v568
        %v841 = vmul.f32 %v823, %v569
        %v842 = vmul.f32 %v819, %v570
        %v843 = vmul.f32 %v823, %v571
        %v844 = vmul.f32 %v819, %v572
        %v845 = vmul.f32 %v823, %v573
        %v846 = vmul.f32 %v819, %v574
        %v847 = vmul.f32 %v823, %v575
        %v848 = vmul.f32 %v819, %v576
        %v849 = vmul.f32 %v823, %v577
        %v850 = vmul.f32 %v819, %v578
        %v851 = vmul.f32 %v823, %v579
        %v852 = vmul.f32 %v819, %v580
        %v853 = vmul.f32 %v823, %v581
        %v854 = vmul.f32 %v819, %v582
        %v855 = vmul.f32 %v823, %v583
        %v856 = vmul.f32 %v819, %v584
        %v857 = vmul.f32 %v823, %v585
        %v858 = vmul.f32 %v819, %v586
        %v859 = vmul.f32 %v823, %v587
        %v860 = vmul.f32 %v819, %v588
        %v861 = vmul.f32 %v823, %v589
        %v862 = vmul.f32 %v819, %v590
        %v863 = vmul.f32 %v823, %v591
        %v864 = vmul.f32 %v819, %v592
        %v865 = vmul.f32 %v823, %v593
        %v866 = vmul.f32 %v819, %v594
        %v867 = vmul.f32 %v823, %v595
        %v868 = vmul.f32 %v819, %v596
        %v869 = vmul.f32 %v823, %v597
        %v870 = vmul.f32 %v819, %v598
        %v871 = vmul.f32 %v823, %v599
        %v872 = vmul.f32 %v819, %v600
        %v873 = vmul.f32 %v823, %v601
        %v874 = vmul.f32 %v819, %v602
        %v875 = vmul.f32 %v823, %v603
        %v876 = vmul.f32 %v819, %v604
        %v877 = vmul.f32 %v823, %v605
        %v878 = vmul.f32 %v819, %v606
        %v879 = vmul.f32 %v823, %v607
        %v880 = vmul.f32 %v819, %v608
        %v881 = vmul.f32 %v823, %v609
        %v882 = vmul.f32 %v819, %v610
        %v883 = vmul.f32 %v823, %v611
        %v884 = vmul.f32 %v819, %v612
        %v885 = vmul.f32 %v823, %v613
        %v886 = vmul.f32 %v819, %v614
        %v887 = vmul.f32 %v823, %v615
        %v888 = vlaneseq
        %v889 = vshrl.u32 %v888, 7
        %v890 = vsub.s32 3, %v889
        %v891 = vrot.slane %v315, %v890
        %v892 = vlaneseq
        %v893 = vshrl.u32 %v892, 7
        %v894 = vsub.s32 3, %v893
        %v895 = vrot.slane %v316, %v894
        %v896 = vmul.f32 %v891, %v752
        %v897 = vmul.f32 %v895, %v753
        %v898 = vmul.f32 %v891, %v754
        %v899 = vmul.f32 %v895, %v755
        %v900 = vmul.f32 %v891, %v756
        %v901 = vmul.f32 %v895, %v757
        %v902 = vmul.f32 %v891, %v758
        %v903 = vmul.f32 %v895, %v759
        %v904 = vmul.f32 %v891, %v760
        %v905 = vmul.f32 %v895, %v761
        %v906 = vmul.f32 %v891, %v762
        %v907 = vmul.f32 %v895, %v763
        %v908 = vmul.f32 %v891, %v764
        %v909 = vmul.f32 %v895, %v765
        %v910 = vmul.f32 %v891, %v766
        %v911 = vmul.f32 %v895, %v767
        %v912 = vmul.f32 %v891, %v768
        %v913 = vmul.f32 %v895, %v769
        %v914 = vmul.f32 %v891, %v770
        %v915 = vmul.f32 %v895, %v771
        %v916 = vmul.f32 %v891, %v772
        %v917 = vmul.f32 %v895, %v773
        %v918 = vmul.f32 %v891, %v774
        %v919 = vmul.f32 %v895, %v775
        %v920 = vmul.f32 %v891, %v776
        %v921 = vmul.f32 %v895, %v777
        %v922 = vmul.f32 %v891, %v778
        %v923 = vmul.f32 %v895, %v779
        %v924 = vmul.f32 %v891, %v780
        %v925 = vmul.f32 %v895, %v781
        %v926 = vmul.f32 %v891, %v782
        %v927 = vmul.f32 %v895, %v783
        %v928 = vmul.f32 %v891, %v784
        %v929 = vmul.f32 %v895, %v785
        %v930 = vmul.f32 %v891, %v786
        %v931 = vmul.f32 %v895, %v787
        %v932 = vmul.f32 %v891, %v788
        %v933 = vmul.f32 %v895, %v789
        %v934 = vmul.f32 %v891, %v790
        %v935 = vmul.f32 %v895, %v791
        %v936 = vmul.f32 %v891, %v792
        %v937 = vmul.f32 %v895, %v793
        %v938 = vmul.f32 %v891, %v794
        %v939 = vmul.f32 %v895, %v795
        %v940 = vmul.f32 %v891, %v796
        %v941 = vmul.f32 %v895, %v797
        %v942 = vmul.f32 %v891, %v798
        %v943 = vmul.f32 %v895, %v799
        %v944 = vmul.f32 %v891, %v800
        %v945 = vmul.f32 %v895, %v801
        %v946 = vmul.f32 %v891, %v802
        %v947 = vmul.f32 %v895, %v803
        %v948 = vmul.f32 %v891, %v804
        %v949 = vmul.f32 %v895, %v805
        %v950 = vmul.f32 %v891, %v806
        %v951 = vmul.f32 %v895, %v807
        %v952 = vmul.f32 %v891, %v808
        %v953 = vmul.f32 %v895, %v809
        %v954 = vmul.f32 %v891, %v810
        %v955 = vmul.f32 %v895, %v811
        %v956 = vmul.f32 %v891, %v812
        %v957 = vmul.f32 %v895, %v813
        %v958 = vmul.f32 %v891, %v814
        %v959 = vmul.f32 %v895, %v815
        %v960 = vadd.f32 %v824, %v896
        %v961 = vadd.f32 %v825, %v897
        %v962 = vadd.f32 %v826, %v898
        %v963 = vadd.f32 %v827, %v899
        %v964 = vadd.f32 %v828, %v900
        %v965 = vadd.f32 %v829, %v901
        %v966 = vadd.f32 %v830, %v902
        %v967 = vadd.f32 %v831, %v903
        %v968 = vadd.f32 %v832, %v904
        %v969 = vadd.f32 %v833, %v905
        %v970 = vadd.f32 %v834, %v906
        %v971 = vadd.f32 %v835, %v907
        %v972 = vadd.f32 %v836, %v908
        %v973 = vadd.f32 %v837, %v909
        %v974 = vadd.f32 %v838, %v910
        %v975 = vadd.f32 %v839, %v911
        %v976 = vadd.f32 %v840, %v912
        %v977 = vadd.f32 %v841, %v913
        %v978 = vadd.f32 %v842, %v914
        %v979 = vadd.f32 %v843, %v915
        %v980 = vadd.f32 %v844, %v916
        %v981 = vadd.f32 %v845, %v917
        %v982 = vadd.f32 %v846, %v918
        %v983 = vadd.f32 %v847, %v919
        %v984 = vadd.f32 %v848, %v920
        %v985 = vadd.f32 %v849, %v921
        %v986 = vadd.f32 %v850, %v922
        %v987 = vadd.f32 %v851, %v923
        %v988 = vadd.f32 %v852, %v924
        %v989 = vadd.f32 %v853, %v925
        %v990 = vadd.f32 %v854, %v926
        %v991 = vadd.f32 %v855, %v927
        %v992 = vadd.f32 %v856, %v928
        %v993 = vadd.f32 %v857, %v929
        %v994 = vadd.f32 %v858, %v930
        %v995 = vadd.f32 %v859, %v931
        %v996 = vadd.f32 %v860, %v932
        %v997 = vadd.f32 %v861, %v933
        %v998 = vadd.f32 %v862, %v934
        %v999 = vadd.f32 %v863, %v935
        %v1000 = vadd.f32 %v864, %v936
        %v1001 = vadd.f32 %v865, %v937
        %v1002 = vadd.f32 %v866, %v938
        %v1003 = vadd.f32 %v867, %v939
        %v1004 = vadd.f32 %v868, %v940
        %v1005 = vadd.f32 %v869, %v941
        %v1006 = vadd.f32 %v870, %v942
        %v1007 = vadd.f32 %v871, %v943
        %v1008 = vadd.f32 %v872, %v944
        %v1009 = vadd.f32 %v873, %v945
        %v1010 = vadd.f32 %v874, %v946
        %v1011 = vadd.f32 %v875, %v947
        %v1012 = vadd.f32 %v876, %v948
        %v1013 = vadd.f32 %v877, %v949
        %v1014 = vadd.f32 %v878, %v950
        %v1015 = vadd.f32 %v879, %v951
        %v1016 = vadd.f32 %v880, %v952
        %v1017 = vadd.f32 %v881, %v953
        %v1018 = vadd.f32 %v882, %v954
        %v1019 = vadd.f32 %v883, %v955
        %v1020 = vadd.f32 %v884, %v956
        %v1021 = vadd.f32 %v885, %v957
        %v1022 = vadd.f32 %v886, %v958
        %v1023 = vadd.f32 %v887, %v959
        %v1024 = vmul.f32 %v552, %v960
        %v1025 = vmul.f32 %v553, %v961
        %v1026 = vmul.f32 %v554, %v962
        %v1027 = vmul.f32 %v555, %v963
        %v1028 = vmul.f32 %v556, %v964
        %v1029 = vmul.f32 %v557, %v965
        %v1030 = vmul.f32 %v558, %v966
        %v1031 = vmul.f32 %v559, %v967
        %v1032 = vmul.f32 %v560, %v968
        %v1033 = vmul.f32 %v561, %v969
        %v1034 = vmul.f32 %v562, %v970
        %v1035 = vmul.f32 %v563, %v971
        %v1036 = vmul.f32 %v564, %v972
        %v1037 = vmul.f32 %v565, %v973
        %v1038 = vmul.f32 %v566, %v974
        %v1039 = vmul.f32 %v567, %v975
        %v1040 = vmul.f32 %v568, %v976
        %v1041 = vmul.f32 %v569, %v977
        %v1042 = vmul.f32 %v570, %v978
        %v1043 = vmul.f32 %v571, %v979
        %v1044 = vmul.f32 %v572, %v980
        %v1045 = vmul.f32 %v573, %v981
        %v1046 = vmul.f32 %v574, %v982
        %v1047 = vmul.f32 %v575, %v983
        %v1048 = vmul.f32 %v576, %v984
        %v1049 = vmul.f32 %v577, %v985
        %v1050 = vmul.f32 %v578, %v986
        %v1051 = vmul.f32 %v579, %v987
        %v1052 = vmul.f32 %v580, %v988
        %v1053 = vmul.f32 %v581, %v989
        %v1054 = vmul.f32 %v582, %v990
        %v1055 = vmul.f32 %v583, %v991
        %v1056 = vmul.f32 %v584, %v992
        %v1057 = vmul.f32 %v585, %v993
        %v1058 = vmul.f32 %v586, %v994
        %v1059 = vmul.f32 %v587, %v995
        %v1060 = vmul.f32 %v588, %v996
        %v1061 = vmul.f32 %v589, %v997
        %v1062 = vmul.f32 %v590, %v998
        %v1063 = vmul.f32 %v591, %v999
        %v1064 = vmul.f32 %v592, %v1000
        %v1065 = vmul.f32 %v593, %v1001
        %v1066 = vmul.f32 %v594, %v1002
        %v1067 = vmul.f32 %v595, %v1003
        %v1068 = vmul.f32 %v596, %v1004
        %v1069 = vmul.f32 %v597, %v1005
        %v1070 = vmul.f32 %v598, %v1006
        %v1071 = vmul.f32 %v599, %v1007
        %v1072 = vmul.f32 %v600, %v1008
        %v1073 = vmul.f32 %v601, %v1009
        %v1074 = vmul.f32 %v602, %v1010
        %v1075 = vmul.f32 %v603, %v1011
        %v1076 = vmul.f32 %v604, %v1012
        %v1077 = vmul.f32 %v605, %v1013
        %v1078 = vmul.f32 %v606, %v1014
        %v1079 = vmul.f32 %v607, %v1015
        %v1080 = vmul.f32 %v608, %v1016
        %v1081 = vmul.f32 %v609, %v1017
        %v1082 = vmul.f32 %v610, %v1018
        %v1083 = vmul.f32 %v611, %v1019
        %v1084 = vmul.f32 %v612, %v1020
        %v1085 = vmul.f32 %v613, %v1021
        %v1086 = vmul.f32 %v614, %v1022
        %v1087 = vmul.f32 %v615, %v1023
        %v1088 = vlaneseq
        %v1089 = vshrl.u32 %v1088, 7
        %v1090 = vsub.s32 4, %v1089
        %v1091 = vrot.slane %v315, %v1090
        %v1092 = vlaneseq
        %v1093 = vshrl.u32 %v1092, 7
        %v1094 = vsub.s32 4, %v1093
        %v1095 = vrot.slane %v316, %v1094
        %v1096 = vmul.f32 %v1091, %v752
        %v1097 = vmul.f32 %v1095, %v753
        %v1098 = vmul.f32 %v1091, %v754
        %v1099 = vmul.f32 %v1095, %v755
        %v1100 = vmul.f32 %v1091, %v756
        %v1101 = vmul.f32 %v1095, %v757
        %v1102 = vmul.f32 %v1091, %v758
        %v1103 = vmul.f32 %v1095, %v759
        %v1104 = vmul.f32 %v1091, %v760
        %v1105 = vmul.f32 %v1095, %v761
        %v1106 = vmul.f32 %v1091, %v762
        %v1107 = vmul.f32 %v1095, %v763
        %v1108 = vmul.f32 %v1091, %v764
        %v1109 = vmul.f32 %v1095, %v765
        %v1110 = vmul.f32 %v1091, %v766
        %v1111 = vmul.f32 %v1095, %v767
        %v1112 = vmul.f32 %v1091, %v768
        %v1113 = vmul.f32 %v1095, %v769
        %v1114 = vmul.f32 %v1091, %v770
        %v1115 = vmul.f32 %v1095, %v771
        %v1116 = vmul.f32 %v1091, %v772
        %v1117 = vmul.f32 %v1095, %v773
        %v1118 = vmul.f32 %v1091, %v774
        %v1119 = vmul.f32 %v1095, %v775
        %v1120 = vmul.f32 %v1091, %v776
        %v1121 = vmul.f32 %v1095, %v777
        %v1122 = vmul.f32 %v1091, %v778
        %v1123 = vmul.f32 %v1095, %v779
        %v1124 = vmul.f32 %v1091, %v780
        %v1125 = vmul.f32 %v1095, %v781
        %v1126 = vmul.f32 %v1091, %v782
        %v1127 = vmul.f32 %v1095, %v783
        %v1128 = vmul.f32 %v1091, %v784
        %v1129 = vmul.f32 %v1095, %v785
        %v1130 = vmul.f32 %v1091, %v786
        %v1131 = vmul.f32 %v1095, %v787
        %v1132 = vmul.f32 %v1091, %v788
        %v1133 = vmul.f32 %v1095, %v789
        %v1134 = vmul.f32 %v1091, %v790
        %v1135 = vmul.f32 %v1095, %v791
        %v1136 = vmul.f32 %v1091, %v792
        %v1137 = vmul.f32 %v1095, %v793
        %v1138 = vmul.f32 %v1091, %v794
        %v1139 = vmul.f32 %v1095, %v795
        %v1140 = vmul.f32 %v1091, %v796
        %v1141 = vmul.f32 %v1095, %v797
        %v1142 = vmul.f32 %v1091, %v798
        %v1143 = vmul.f32 %v1095, %v799
        %v1144 = vmul.f32 %v1091, %v800
        %v1145 = vmul.f32 %v1095, %v801
        %v1146 = vmul.f32 %v1091, %v802
        %v1147 = vmul.f32 %v1095, %v803
        %v1148 = vmul.f32 %v1091, %v804
        %v1149 = vmul.f32 %v1095, %v805
        %v1150 = vmul.f32 %v1091, %v806
        %v1151 = vmul.f32 %v1095, %v807
        %v1152 = vmul.f32 %v1091, %v808
        %v1153 = vmul.f32 %v1095, %v809
        %v1154 = vmul.f32 %v1091, %v810
        %v1155 = vmul.f32 %v1095, %v811
        %v1156 = vmul.f32 %v1091, %v812
        %v1157 = vmul.f32 %v1095, %v813
        %v1158 = vmul.f32 %v1091, %v814
        %v1159 = vmul.f32 %v1095, %v815
        %v1160 = vmul.f32 %v1096, %v752
        %v1161 = vmul.f32 %v1097, %v753
        %v1162 = vmul.f32 %v1098, %v754
        %v1163 = vmul.f32 %v1099, %v755
        %v1164 = vmul.f32 %v1100, %v756
        %v1165 = vmul.f32 %v1101, %v757
        %v1166 = vmul.f32 %v1102, %v758
        %v1167 = vmul.f32 %v1103, %v759
        %v1168 = vmul.f32 %v1104, %v760
        %v1169 = vmul.f32 %v1105, %v761
        %v1170 = vmul.f32 %v1106, %v762
        %v1171 = vmul.f32 %v1107, %v763
        %v1172 = vmul.f32 %v1108, %v764
        %v1173 = vmul.f32 %v1109, %v765
        %v1174 = vmul.f32 %v1110, %v766
        %v1175 = vmul.f32 %v1111, %v767
        %v1176 = vmul.f32 %v1112, %v768
        %v1177 = vmul.f32 %v1113, %v769
        %v1178 = vmul.f32 %v1114, %v770
        %v1179 = vmul.f32 %v1115, %v771
        %v1180 = vmul.f32 %v1116, %v772
        %v1181 = vmul.f32 %v1117, %v773
        %v1182 = vmul.f32 %v1118, %v774
        %v1183 = vmul.f32 %v1119, %v775
        %v1184 = vmul.f32 %v1120, %v776
        %v1185 = vmul.f32 %v1121, %v777
        %v1186 = vmul.f32 %v1122, %v778
        %v1187 = vmul.f32 %v1123, %v779
        %v1188 = vmul.f32 %v1124, %v780
        %v1189 = vmul.f32 %v1125, %v781
        %v1190 = vmul.f32 %v1126, %v782
        %v1191 = vmul.f32 %v1127, %v783
        %v1192 = vmul.f32 %v1128, %v784
        %v1193 = vmul.f32 %v1129, %v785
        %v1194 = vmul.f32 %v1130, %v786
        %v1195 = vmul.f32 %v1131, %v787
        %v1196 = vmul.f32 %v1132, %v788
        %v1197 = vmul.f32 %v1133, %v789
        %v1198 = vmul.f32 %v1134, %v790
        %v1199 = vmul.f32 %v1135, %v791
        %v1200 = vmul.f32 %v1136, %v792
        %v1201 = vmul.f32 %v1137, %v793
        %v1202 = vmul.f32 %v1138, %v794
        %v1203 = vmul.f32 %v1139, %v795
        %v1204 = vmul.f32 %v1140, %v796
        %v1205 = vmul.f32 %v1141, %v797
        %v1206 = vmul.f32 %v1142, %v798
        %v1207 = vmul.f32 %v1143, %v799
        %v1208 = vmul.f32 %v1144, %v800
        %v1209 = vmul.f32 %v1145, %v801
        %v1210 = vmul.f32 %v1146, %v802
        %v1211 = vmul.f32 %v1147, %v803
        %v1212 = vmul.f32 %v1148, %v804
        %v1213 = vmul.f32 %v1149, %v805
        %v1214 = vmul.f32 %v1150, %v806
        %v1215 = vmul.f32 %v1151, %v807
        %v1216 = vmul.f32 %v1152, %v808
        %v1217 = vmul.f32 %v1153, %v809
        %v1218 = vmul.f32 %v1154, %v810
        %v1219 = vmul.f32 %v1155, %v811
        %v1220 = vmul.f32 %v1156, %v812
        %v1221 = vmul.f32 %v1157, %v813
        %v1222 = vmul.f32 %v1158, %v814
        %v1223 = vmul.f32 %v1159, %v815
        %v1224 = vadd.f32 %v1024, %v1160
        %v1225 = vadd.f32 %v1025, %v1161
        %v1226 = vadd.f32 %v1026, %v1162
        %v1227 = vadd.f32 %v1027, %v1163
        %v1228 = vadd.f32 %v1028, %v1164
        %v1229 = vadd.f32 %v1029, %v1165
        %v1230 = vadd.f32 %v1030, %v1166
        %v1231 = vadd.f32 %v1031, %v1167
        %v1232 = vadd.f32 %v1032, %v1168
        %v1233 = vadd.f32 %v1033, %v1169
        %v1234 = vadd.f32 %v1034, %v1170
        %v1235 = vadd.f32 %v1035, %v1171
        %v1236 = vadd.f32 %v1036, %v1172
        %v1237 = vadd.f32 %v1037, %v1173
        %v1238 = vadd.f32 %v1038, %v1174
        %v1239 = vadd.f32 %v1039, %v1175
        %v1240 = vadd.f32 %v1040, %v1176
        %v1241 = vadd.f32 %v1041, %v1177
        %v1242 = vadd.f32 %v1042, %v1178
        %v1243 = vadd.f32 %v1043, %v1179
        %v1244 = vadd.f32 %v1044, %v1180
        %v1245 = vadd.f32 %v1045, %v1181
        %v1246 = vadd.f32 %v1046, %v1182
        %v1247 = vadd.f32 %v1047, %v1183
        %v1248 = vadd.f32 %v1048, %v1184
        %v1249 = vadd.f32 %v1049, %v1185
        %v1250 = vadd.f32 %v1050, %v1186
        %v1251 = vadd.f32 %v1051, %v1187
        %v1252 = vadd.f32 %v1052, %v1188
        %v1253 = vadd.f32 %v1053, %v1189
        %v1254 = vadd.f32 %v1054, %v1190
        %v1255 = vadd.f32 %v1055, %v1191
        %v1256 = vadd.f32 %v1056, %v1192
        %v1257 = vadd.f32 %v1057, %v1193
        %v1258 = vadd.f32 %v1058, %v1194
        %v1259 = vadd.f32 %v1059, %v1195
        %v1260 = vadd.f32 %v1060, %v1196
        %v1261 = vadd.f32 %v1061, %v1197
        %v1262 = vadd.f32 %v1062, %v1198
        %v1263 = vadd.f32 %v1063, %v1199
        %v1264 = vadd.f32 %v1064, %v1200
        %v1265 = vadd.f32 %v1065, %v1201
        %v1266 = vadd.f32 %v1066, %v1202
        %v1267 = vadd.f32 %v1067, %v1203
        %v1268 = vadd.f32 %v1068, %v1204
        %v1269 = vadd.f32 %v1069, %v1205
        %v1270 = vadd.f32 %v1070, %v1206
        %v1271 = vadd.f32 %v1071, %v1207
        %v1272 = vadd.f32 %v1072, %v1208
        %v1273 = vadd.f32 %v1073, %v1209
        %v1274 = vadd.f32 %v1074, %v1210
        %v1275 = vadd.f32 %v1075, %v1211
        %v1276 = vadd.f32 %v1076, %v1212
        %v1277 = vadd.f32 %v1077, %v1213
        %v1278 = vadd.f32 %v1078, %v1214
        %v1279 = vadd.f32 %v1079, %v1215
        %v1280 = vadd.f32 %v1080, %v1216
        %v1281 = vadd.f32 %v1081, %v1217
        %v1282 = vadd.f32 %v1082, %v1218
        %v1283 = vadd.f32 %v1083, %v1219
        %v1284 = vadd.f32 %v1084, %v1220
        %v1285 = vadd.f32 %v1085, %v1221
        %v1286 = vadd.f32 %v1086, %v1222
        %v1287 = vadd.f32 %v1087, %v1223
        %v1288 = vmul.f32 %v1224, 1.442695
        %v1289 = vpow.pop %v1288
        %v1290 = vmul.f32 %v1225, 1.442695
        %v1291 = vpow.pop %v1290
        %v1292 = vmul.f32 %v1226, 1.442695
        %v1293 = vpow.pop %v1292
        %v1294 = vmul.f32 %v1227, 1.442695
        %v1295 = vpow.pop %v1294
        %v1296 = vmul.f32 %v1228, 1.442695
        %v1297 = vpow.pop %v1296
        %v1298 = vmul.f32 %v1229, 1.442695
        %v1299 = vpow.pop %v1298
        %v1300 = vmul.f32 %v1230, 1.442695
        %v1301 = vpow.pop %v1300
        %v1302 = vmul.f32 %v1231, 1.442695
        %v1303 = vpow.pop %v1302
        %v1304 = vmul.f32 %v1232, 1.442695
        %v1305 = vpow.pop %v1304
        %v1306 = vmul.f32 %v1233, 1.442695
        %v1307 = vpow.pop %v1306
        %v1308 = vmul.f32 %v1234, 1.442695
        %v1309 = vpow.pop %v1308
        %v1310 = vmul.f32 %v1235, 1.442695
        %v1311 = vpow.pop %v1310
        %v1312 = vmul.f32 %v1236, 1.442695
        %v1313 = vpow.pop %v1312
        %v1314 = vmul.f32 %v1237, 1.442695
        %v1315 = vpow.pop %v1314
        %v1316 = vmul.f32 %v1238, 1.442695
        %v1317 = vpow.pop %v1316
        %v1318 = vmul.f32 %v1239, 1.442695
        %v1319 = vpow.pop %v1318
        %v1320 = vmul.f32 %v1240, 1.442695
        %v1321 = vpow.pop %v1320
        %v1322 = vmul.f32 %v1241, 1.442695
        %v1323 = vpow.pop %v1322
        %v1324 = vmul.f32 %v1242, 1.442695
        %v1325 = vpow.pop %v1324
        %v1326 = vmul.f32 %v1243, 1.442695
        %v1327 = vpow.pop %v1326
        %v1328 = vmul.f32 %v1244, 1.442695
        %v1329 = vpow.pop %v1328
        %v1330 = vmul.f32 %v1245, 1.442695
        %v1331 = vpow.pop %v1330
        %v1332 = vmul.f32 %v1246, 1.442695
        %v1333 = vpow.pop %v1332
        %v1334 = vmul.f32 %v1247, 1.442695
        %v1335 = vpow.pop %v1334
        %v1336 = vmul.f32 %v1248, 1.442695
        %v1337 = vpow.pop %v1336
        %v1338 = vmul.f32 %v1249, 1.442695
        %v1339 = vpow.pop %v1338
        %v1340 = vmul.f32 %v1250, 1.442695
        %v1341 = vpow.pop %v1340
        %v1342 = vmul.f32 %v1251, 1.442695
        %v1343 = vpow.pop %v1342
        %v1344 = vmul.f32 %v1252, 1.442695
        %v1345 = vpow.pop %v1344
        %v1346 = vmul.f32 %v1253, 1.442695
        %v1347 = vpow.pop %v1346
        %v1348 = vmul.f32 %v1254, 1.442695
        %v1349 = vpow.pop %v1348
        %v1350 = vmul.f32 %v1255, 1.442695
        %v1351 = vpow.pop %v1350
        %v1352 = vmul.f32 %v1256, 1.442695
        %v1353 = vpow.pop %v1352
        %v1354 = vmul.f32 %v1257, 1.442695
        %v1355 = vpow.pop %v1354
        %v1356 = vmul.f32 %v1258, 1.442695
        %v1357 = vpow.pop %v1356
        %v1358 = vmul.f32 %v1259, 1.442695
        %v1359 = vpow.pop %v1358
        %v1360 = vmul.f32 %v1260, 1.442695
        %v1361 = vpow.pop %v1360
        %v1362 = vmul.f32 %v1261, 1.442695
        %v1363 = vpow.pop %v1362
        %v1364 = vmul.f32 %v1262, 1.442695
        %v1365 = vpow.pop %v1364
        %v1366 = vmul.f32 %v1263, 1.442695
        %v1367 = vpow.pop %v1366
        %v1368 = vmul.f32 %v1264, 1.442695
        %v1369 = vpow.pop %v1368
        %v1370 = vmul.f32 %v1265, 1.442695
        %v1371 = vpow.pop %v1370
        %v1372 = vmul.f32 %v1266, 1.442695
        %v1373 = vpow.pop %v1372
        %v1374 = vmul.f32 %v1267, 1.442695
        %v1375 = vpow.pop %v1374
        %v1376 = vmul.f32 %v1268, 1.442695
        %v1377 = vpow.pop %v1376
        %v1378 = vmul.f32 %v1269, 1.442695
        %v1379 = vpow.pop %v1378
        %v1380 = vmul.f32 %v1270, 1.442695
        %v1381 = vpow.pop %v1380
        %v1382 = vmul.f32 %v1271, 1.442695
        %v1383 = vpow.pop %v1382
        %v1384 = vmul.f32 %v1272, 1.442695
        %v1385 = vpow.pop %v1384
        %v1386 = vmul.f32 %v1273, 1.442695
        %v1387 = vpow.pop %v1386
        %v1388 = vmul.f32 %v1274, 1.442695
        %v1389 = vpow.pop %v1388
        %v1390 = vmul.f32 %v1275, 1.442695
        %v1391 = vpow.pop %v1390
        %v1392 = vmul.f32 %v1276, 1.442695
        %v1393 = vpow.pop %v1392
        %v1394 = vmul.f32 %v1277, 1.442695
        %v1395 = vpow.pop %v1394
        %v1396 = vmul.f32 %v1278, 1.442695
        %v1397 = vpow.pop %v1396
        %v1398 = vmul.f32 %v1279, 1.442695
        %v1399 = vpow.pop %v1398
        %v1400 = vmul.f32 %v1280, 1.442695
        %v1401 = vpow.pop %v1400
        %v1402 = vmul.f32 %v1281, 1.442695
        %v1403 = vpow.pop %v1402
        %v1404 = vmul.f32 %v1282, 1.442695
        %v1405 = vpow.pop %v1404
        %v1406 = vmul.f32 %v1283, 1.442695
        %v1407 = vpow.pop %v1406
        %v1408 = vmul.f32 %v1284, 1.442695
        %v1409 = vpow.pop %v1408
        %v1410 = vmul.f32 %v1285, 1.442695
        %v1411 = vpow.pop %v1410
        %v1412 = vmul.f32 %v1286, 1.442695
        %v1413 = vpow.pop %v1412
        %v1414 = vmul.f32 %v1287, 1.442695
        %v1415 = vpow.pop %v1414
        %v1416 = vlaneseq
        %v1417 = vshrl.u32 %v1416, 7
        %v1418 = vsub.s32 5, %v1417
        %v1419 = vrot.slane %v315, %v1418
        %v1420 = vlaneseq
        %v1421 = vshrl.u32 %v1420, 7
        %v1422 = vsub.s32 5, %v1421
        %v1423 = vrot.slane %v316, %v1422
        %v1424 = vmul.f32 %v1419, %v1289
        %v1425 = vmul.f32 %v1423, %v1291
        %v1426 = vmul.f32 %v1419, %v1293
        %v1427 = vmul.f32 %v1423, %v1295
        %v1428 = vmul.f32 %v1419, %v1297
        %v1429 = vmul.f32 %v1423, %v1299
        %v1430 = vmul.f32 %v1419, %v1301
        %v1431 = vmul.f32 %v1423, %v1303
        %v1432 = vmul.f32 %v1419, %v1305
        %v1433 = vmul.f32 %v1423, %v1307
        %v1434 = vmul.f32 %v1419, %v1309
        %v1435 = vmul.f32 %v1423, %v1311
        %v1436 = vmul.f32 %v1419, %v1313
        %v1437 = vmul.f32 %v1423, %v1315
        %v1438 = vmul.f32 %v1419, %v1317
        %v1439 = vmul.f32 %v1423, %v1319
        %v1440 = vmul.f32 %v1419, %v1321
        %v1441 = vmul.f32 %v1423, %v1323
        %v1442 = vmul.f32 %v1419, %v1325
        %v1443 = vmul.f32 %v1423, %v1327
        %v1444 = vmul.f32 %v1419, %v1329
        %v1445 = vmul.f32 %v1423, %v1331
        %v1446 = vmul.f32 %v1419, %v1333
        %v1447 = vmul.f32 %v1423, %v1335
        %v1448 = vmul.f32 %v1419, %v1337
        %v1449 = vmul.f32 %v1423, %v1339
        %v1450 = vmul.f32 %v1419, %v1341
        %v1451 = vmul.f32 %v1423, %v1343
        %v1452 = vmul.f32 %v1419, %v1345
        %v1453 = vmul.f32 %v1423, %v1347
        %v1454 = vmul.f32 %v1419, %v1349
        %v1455 = vmul.f32 %v1423, %v1351
        %v1456 = vmul.f32 %v1419, %v1353
        %v1457 = vmul.f32 %v1423, %v1355
        %v1458 = vmul.f32 %v1419, %v1357
        %v1459 = vmul.f32 %v1423, %v1359
        %v1460 = vmul.f32 %v1419, %v1361
        %v1461 = vmul.f32 %v1423, %v1363
        %v1462 = vmul.f32 %v1419, %v1365
        %v1463 = vmul.f32 %v1423, %v1367
        %v1464 = vmul.f32 %v1419, %v1369
        %v1465 = vmul.f32 %v1423, %v1371
        %v1466 = vmul.f32 %v1419, %v1373
        %v1467 = vmul.f32 %v1423, %v1375
        %v1468 = vmul.f32 %v1419, %v1377
        %v1469 = vmul.f32 %v1423, %v1379
        %v1470 = vmul.f32 %v1419, %v1381
        %v1471 = vmul.f32 %v1423, %v1383
        %v1472 = vmul.f32 %v1419, %v1385
        %v1473 = vmul.f32 %v1423, %v1387
        %v1474 = vmul.f32 %v1419, %v1389
        %v1475 = vmul.f32 %v1423, %v1391
        %v1476 = vmul.f32 %v1419, %v1393
        %v1477 = vmul.f32 %v1423, %v1395
        %v1478 = vmul.f32 %v1419, %v1397
        %v1479 = vmul.f32 %v1423, %v1399
        %v1480 = vmul.f32 %v1419, %v1401
        %v1481 = vmul.f32 %v1423, %v1403
        %v1482 = vmul.f32 %v1419, %v1405
        %v1483 = vmul.f32 %v1423, %v1407
        %v1484 = vmul.f32 %v1419, %v1409
        %v1485 = vmul.f32 %v1423, %v1411
        %v1486 = vmul.f32 %v1419, %v1413
        %v1487 = vmul.f32 %v1423, %v1415
        %v1488 = vmin.f32 %v1424, 0.99
        %v1489 = vmin.f32 %v1425, 0.99
        %v1490 = vmin.f32 %v1426, 0.99
        %v1491 = vmin.f32 %v1427, 0.99
        %v1492 = vmin.f32 %v1428, 0.99
        %v1493 = vmin.f32 %v1429, 0.99
        %v1494 = vmin.f32 %v1430, 0.99
        %v1495 = vmin.f32 %v1431, 0.99
        %v1496 = vmin.f32 %v1432, 0.99
        %v1497 = vmin.f32 %v1433, 0.99
        %v1498 = vmin.f32 %v1434, 0.99
        %v1499 = vmin.f32 %v1435, 0.99
        %v1500 = vmin.f32 %v1436, 0.99
        %v1501 = vmin.f32 %v1437, 0.99
        %v1502 = vmin.f32 %v1438, 0.99
        %v1503 = vmin.f32 %v1439, 0.99
        %v1504 = vmin.f32 %v1440, 0.99
        %v1505 = vmin.f32 %v1441, 0.99
        %v1506 = vmin.f32 %v1442, 0.99
        %v1507 = vmin.f32 %v1443, 0.99
        %v1508 = vmin.f32 %v1444, 0.99
        %v1509 = vmin.f32 %v1445, 0.99
        %v1510 = vmin.f32 %v1446, 0.99
        %v1511 = vmin.f32 %v1447, 0.99
        %v1512 = vmin.f32 %v1448, 0.99
        %v1513 = vmin.f32 %v1449, 0.99
        %v1514 = vmin.f32 %v1450, 0.99
        %v1515 = vmin.f32 %v1451, 0.99
        %v1516 = vmin.f32 %v1452, 0.99
        %v1517 = vmin.f32 %v1453, 0.99
        %v1518 = vmin.f32 %v1454, 0.99
        %v1519 = vmin.f32 %v1455, 0.99
        %v1520 = vmin.f32 %v1456, 0.99
        %v1521 = vmin.f32 %v1457, 0.99
        %v1522 = vmin.f32 %v1458, 0.99
        %v1523 = vmin.f32 %v1459, 0.99
        %v1524 = vmin.f32 %v1460, 0.99
        %v1525 = vmin.f32 %v1461, 0.99
        %v1526 = vmin.f32 %v1462, 0.99
        %v1527 = vmin.f32 %v1463, 0.99
        %v1528 = vmin.f32 %v1464, 0.99
        %v1529 = vmin.f32 %v1465, 0.99
        %v1530 = vmin.f32 %v1466, 0.99
        %v1531 = vmin.f32 %v1467, 0.99
        %v1532 = vmin.f32 %v1468, 0.99
        %v1533 = vmin.f32 %v1469, 0.99
        %v1534 = vmin.f32 %v1470, 0.99
        %v1535 = vmin.f32 %v1471, 0.99
        %v1536 = vmin.f32 %v1472, 0.99
        %v1537 = vmin.f32 %v1473, 0.99
        %v1538 = vmin.f32 %v1474, 0.99
        %v1539 = vmin.f32 %v1475, 0.99
        %v1540 = vmin.f32 %v1476, 0.99
        %v1541 = vmin.f32 %v1477, 0.99
        %v1542 = vmin.f32 %v1478, 0.99
        %v1543 = vmin.f32 %v1479, 0.99
        %v1544 = vmin.f32 %v1480, 0.99
        %v1545 = vmin.f32 %v1481, 0.99
        %v1546 = vmin.f32 %v1482, 0.99
        %v1547 = vmin.f32 %v1483, 0.99
        %v1548 = vmin.f32 %v1484, 0.99
        %v1549 = vmin.f32 %v1485, 0.99
        %v1550 = vmin.f32 %v1486, 0.99
        %v1551 = vmin.f32 %v1487, 0.99
        %vm1552 = vcmp.gt.f32.partialorder %v1224, 0.0
        %vm1553 = vcmp.gt.f32.partialorder %v1225, 0.0
        %vm1554 = vcmp.gt.f32.partialorder %v1226, 0.0
        %vm1555 = vcmp.gt.f32.partialorder %v1227, 0.0
        %vm1556 = vcmp.gt.f32.partialorder %v1228, 0.0
        %vm1557 = vcmp.gt.f32.partialorder %v1229, 0.0
        %vm1558 = vcmp.gt.f32.partialorder %v1230, 0.0
        %vm1559 = vcmp.gt.f32.partialorder %v1231, 0.0
        %vm1560 = vcmp.gt.f32.partialorder %v1232, 0.0
        %vm1561 = vcmp.gt.f32.partialorder %v1233, 0.0
        %vm1562 = vcmp.gt.f32.partialorder %v1234, 0.0
        %vm1563 = vcmp.gt.f32.partialorder %v1235, 0.0
        %vm1564 = vcmp.gt.f32.partialorder %v1236, 0.0
        %vm1565 = vcmp.gt.f32.partialorder %v1237, 0.0
        %vm1566 = vcmp.gt.f32.partialorder %v1238, 0.0
        %vm1567 = vcmp.gt.f32.partialorder %v1239, 0.0
        %vm1568 = vcmp.gt.f32.partialorder %v1240, 0.0
        %vm1569 = vcmp.gt.f32.partialorder %v1241, 0.0
        %vm1570 = vcmp.gt.f32.partialorder %v1242, 0.0
        %vm1571 = vcmp.gt.f32.partialorder %v1243, 0.0
        %vm1572 = vcmp.gt.f32.partialorder %v1244, 0.0
        %vm1573 = vcmp.gt.f32.partialorder %v1245, 0.0
        %vm1574 = vcmp.gt.f32.partialorder %v1246, 0.0
        %vm1575 = vcmp.gt.f32.partialorder %v1247, 0.0
        %vm1576 = vcmp.gt.f32.partialorder %v1248, 0.0
        %vm1577 = vcmp.gt.f32.partialorder %v1249, 0.0
        %vm1578 = vcmp.gt.f32.partialorder %v1250, 0.0
        %vm1579 = vcmp.gt.f32.partialorder %v1251, 0.0
        %vm1580 = vcmp.gt.f32.partialorder %v1252, 0.0
        %vm1581 = vcmp.gt.f32.partialorder %v1253, 0.0
        %vm1582 = vcmp.gt.f32.partialorder %v1254, 0.0
        %vm1583 = vcmp.gt.f32.partialorder %v1255, 0.0
        %vm1584 = vcmp.gt.f32.partialorder %v1256, 0.0
        %vm1585 = vcmp.gt.f32.partialorder %v1257, 0.0
        %vm1586 = vcmp.gt.f32.partialorder %v1258, 0.0
        %vm1587 = vcmp.gt.f32.partialorder %v1259, 0.0
        %vm1588 = vcmp.gt.f32.partialorder %v1260, 0.0
        %vm1589 = vcmp.gt.f32.partialorder %v1261, 0.0
        %vm1590 = vcmp.gt.f32.partialorder %v1262, 0.0
        %vm1591 = vcmp.gt.f32.partialorder %v1263, 0.0
        %vm1592 = vcmp.gt.f32.partialorder %v1264, 0.0
        %vm1593 = vcmp.gt.f32.partialorder %v1265, 0.0
        %vm1594 = vcmp.gt.f32.partialorder %v1266, 0.0
        %vm1595 = vcmp.gt.f32.partialorder %v1267, 0.0
        %vm1596 = vcmp.gt.f32.partialorder %v1268, 0.0
        %vm1597 = vcmp.gt.f32.partialorder %v1269, 0.0
        %vm1598 = vcmp.gt.f32.partialorder %v1270, 0.0
        %vm1599 = vcmp.gt.f32.partialorder %v1271, 0.0
        %vm1600 = vcmp.gt.f32.partialorder %v1272, 0.0
        %vm1601 = vcmp.gt.f32.partialorder %v1273, 0.0
        %vm1602 = vcmp.gt.f32.partialorder %v1274, 0.0
        %vm1603 = vcmp.gt.f32.partialorder %v1275, 0.0
        %vm1604 = vcmp.gt.f32.partialorder %v1276, 0.0
        %vm1605 = vcmp.gt.f32.partialorder %v1277, 0.0
        %vm1606 = vcmp.gt.f32.partialorder %v1278, 0.0
        %vm1607 = vcmp.gt.f32.partialorder %v1279, 0.0
        %vm1608 = vcmp.gt.f32.partialorder %v1280, 0.0
        %vm1609 = vcmp.gt.f32.partialorder %v1281, 0.0
        %vm1610 = vcmp.gt.f32.partialorder %v1282, 0.0
        %vm1611 = vcmp.gt.f32.partialorder %v1283, 0.0
        %vm1612 = vcmp.gt.f32.partialorder %v1284, 0.0
        %vm1613 = vcmp.gt.f32.partialorder %v1285, 0.0
        %vm1614 = vcmp.gt.f32.partialorder %v1286, 0.0
        %vm1615 = vcmp.gt.f32.partialorder %v1287, 0.0
        %v1616 = vsel %vm1552, 0.0, %v1488
        %v1617 = vsel %vm1553, 0.0, %v1489
        %v1618 = vsel %vm1554, 0.0, %v1490
        %v1619 = vsel %vm1555, 0.0, %v1491
        %v1620 = vsel %vm1556, 0.0, %v1492
        %v1621 = vsel %vm1557, 0.0, %v1493
        %v1622 = vsel %vm1558, 0.0, %v1494
        %v1623 = vsel %vm1559, 0.0, %v1495
        %v1624 = vsel %vm1560, 0.0, %v1496
        %v1625 = vsel %vm1561, 0.0, %v1497
        %v1626 = vsel %vm1562, 0.0, %v1498
        %v1627 = vsel %vm1563, 0.0, %v1499
        %v1628 = vsel %vm1564, 0.0, %v1500
        %v1629 = vsel %vm1565, 0.0, %v1501
        %v1630 = vsel %vm1566, 0.0, %v1502
        %v1631 = vsel %vm1567, 0.0, %v1503
        %v1632 = vsel %vm1568, 0.0, %v1504
        %v1633 = vsel %vm1569, 0.0, %v1505
        %v1634 = vsel %vm1570, 0.0, %v1506
        %v1635 = vsel %vm1571, 0.0, %v1507
        %v1636 = vsel %vm1572, 0.0, %v1508
        %v1637 = vsel %vm1573, 0.0, %v1509
        %v1638 = vsel %vm1574, 0.0, %v1510
        %v1639 = vsel %vm1575, 0.0, %v1511
        %v1640 = vsel %vm1576, 0.0, %v1512
        %v1641 = vsel %vm1577, 0.0, %v1513
        %v1642 = vsel %vm1578, 0.0, %v1514
        %v1643 = vsel %vm1579, 0.0, %v1515
        %v1644 = vsel %vm1580, 0.0, %v1516
        %v1645 = vsel %vm1581, 0.0, %v1517
        %v1646 = vsel %vm1582, 0.0, %v1518
        %v1647 = vsel %vm1583, 0.0, %v1519
        %v1648 = vsel %vm1584, 0.0, %v1520
        %v1649 = vsel %vm1585, 0.0, %v1521
        %v1650 = vsel %vm1586, 0.0, %v1522
        %v1651 = vsel %vm1587, 0.0, %v1523
        %v1652 = vsel %vm1588, 0.0, %v1524
        %v1653 = vsel %vm1589, 0.0, %v1525
        %v1654 = vsel %vm1590, 0.0, %v1526
        %v1655 = vsel %vm1591, 0.0, %v1527
        %v1656 = vsel %vm1592, 0.0, %v1528
        %v1657 = vsel %vm1593, 0.0, %v1529
        %v1658 = vsel %vm1594, 0.0, %v1530
        %v1659 = vsel %vm1595, 0.0, %v1531
        %v1660 = vsel %vm1596, 0.0, %v1532
        %v1661 = vsel %vm1597, 0.0, %v1533
        %v1662 = vsel %vm1598, 0.0, %v1534
        %v1663 = vsel %vm1599, 0.0, %v1535
        %v1664 = vsel %vm1600, 0.0, %v1536
        %v1665 = vsel %vm1601, 0.0, %v1537
        %v1666 = vsel %vm1602, 0.0, %v1538
        %v1667 = vsel %vm1603, 0.0, %v1539
        %v1668 = vsel %vm1604, 0.0, %v1540
        %v1669 = vsel %vm1605, 0.0, %v1541
        %v1670 = vsel %vm1606, 0.0, %v1542
        %v1671 = vsel %vm1607, 0.0, %v1543
        %v1672 = vsel %vm1608, 0.0, %v1544
        %v1673 = vsel %vm1609, 0.0, %v1545
        %v1674 = vsel %vm1610, 0.0, %v1546
        %v1675 = vsel %vm1611, 0.0, %v1547
        %v1676 = vsel %vm1612, 0.0, %v1548
        %v1677 = vsel %vm1613, 0.0, %v1549
        %v1678 = vsel %vm1614, 0.0, %v1550
        %v1679 = vsel %vm1615, 0.0, %v1551
        %v1680 = vld [vmem:[#allocation2] sm:$0xff]
        %v1681 = vld [vmem:[#allocation2 + $0x8] sm:$0xff]
        %v1682 = vld [vmem:[#allocation2 + $0x10] sm:$0xff]
        %v1683 = vld [vmem:[#allocation2 + $0x18] sm:$0xff]
        %v1684 = vld [vmem:[#allocation2 + $0x20] sm:$0xff]
        %v1685 = vld [vmem:[#allocation2 + $0x28] sm:$0xff]
        %v1686 = vld [vmem:[#allocation2 + $0x30] sm:$0xff]
        %v1687 = vld [vmem:[#allocation2 + $0x38] sm:$0xff]
        %v1688 = vld [vmem:[#allocation2 + $0x40] sm:$0xff]
        %v1689 = vld [vmem:[#allocation2 + $0x48] sm:$0xff]
        %v1690 = vld [vmem:[#allocation2 + $0x50] sm:$0xff]
        %v1691 = vld [vmem:[#allocation2 + $0x58] sm:$0xff]
        %v1692 = vld [vmem:[#allocation2 + $0x60] sm:$0xff]
        %v1693 = vld [vmem:[#allocation2 + $0x68] sm:$0xff]
        %v1694 = vld [vmem:[#allocation2 + $0x70] sm:$0xff]
        %v1695 = vld [vmem:[#allocation2 + $0x78] sm:$0xff]
        %v1696 = vld [vmem:[#allocation2 + $0x80] sm:$0xff]
        %v1697 = vld [vmem:[#allocation2 + $0x88] sm:$0xff]
        %v1698 = vld [vmem:[#allocation2 + $0x90] sm:$0xff]
        %v1699 = vld [vmem:[#allocation2 + $0x98] sm:$0xff]
        %v1700 = vld [vmem:[#allocation2 + $0xa0] sm:$0xff]
        %v1701 = vld [vmem:[#allocation2 + $0xa8] sm:$0xff]
        %v1702 = vld [vmem:[#allocation2 + $0xb0] sm:$0xff]
        %v1703 = vld [vmem:[#allocation2 + $0xb8] sm:$0xff]
        %v1704 = vld [vmem:[#allocation2 + $0xc0] sm:$0xff]
        %v1705 = vld [vmem:[#allocation2 + $0xc8] sm:$0xff]
        %v1706 = vld [vmem:[#allocation2 + $0xd0] sm:$0xff]
        %v1707 = vld [vmem:[#allocation2 + $0xd8] sm:$0xff]
        %v1708 = vld [vmem:[#allocation2 + $0xe0] sm:$0xff]
        %v1709 = vld [vmem:[#allocation2 + $0xe8] sm:$0xff]
        %v1710 = vld [vmem:[#allocation2 + $0xf0] sm:$0xff]
        %v1711 = vld [vmem:[#allocation2 + $0xf8] sm:$0xff]
        %v1712 = vpack.c.bf16 %v1618, %v1616
        %v1713 = vpack.c.bf16 %v1619, %v1617
        %v1714 = vpack.c.bf16 %v1622, %v1620
        %v1715 = vpack.c.bf16 %v1623, %v1621
        %v1716 = vpack.c.bf16 %v1626, %v1624
        %v1717 = vpack.c.bf16 %v1627, %v1625
        %v1718 = vpack.c.bf16 %v1630, %v1628
        %v1719 = vpack.c.bf16 %v1631, %v1629
        %v1720 = vpack.c.bf16 %v1634, %v1632
        %v1721 = vpack.c.bf16 %v1635, %v1633
        %v1722 = vpack.c.bf16 %v1638, %v1636
        %v1723 = vpack.c.bf16 %v1639, %v1637
        %v1724 = vpack.c.bf16 %v1642, %v1640
        %v1725 = vpack.c.bf16 %v1643, %v1641
        %v1726 = vpack.c.bf16 %v1646, %v1644
        %v1727 = vpack.c.bf16 %v1647, %v1645
        %v1728 = vpack.c.bf16 %v1650, %v1648
        %v1729 = vpack.c.bf16 %v1651, %v1649
        %v1730 = vpack.c.bf16 %v1654, %v1652
        %v1731 = vpack.c.bf16 %v1655, %v1653
        %v1732 = vpack.c.bf16 %v1658, %v1656
        %v1733 = vpack.c.bf16 %v1659, %v1657
        %v1734 = vpack.c.bf16 %v1662, %v1660
        %v1735 = vpack.c.bf16 %v1663, %v1661
        %v1736 = vpack.c.bf16 %v1666, %v1664
        %v1737 = vpack.c.bf16 %v1667, %v1665
        %v1738 = vpack.c.bf16 %v1670, %v1668
        %v1739 = vpack.c.bf16 %v1671, %v1669
        %v1740 = vpack.c.bf16 %v1674, %v1672
        %v1741 = vpack.c.bf16 %v1675, %v1673
        %v1742 = vpack.c.bf16 %v1678, %v1676
        %v1743 = vpack.c.bf16 %v1679, %v1677
        %v1776 = vunpack.c.l.b16 %v320
        %v1777 = vunpack.c.l.b16 %v321
        %v1778 = vunpack.c.l.b16 %v322
        %v1779 = vunpack.c.l.b16 %v323
        %v1780 = vunpack.c.l.b16 %v324
        %v1781 = vunpack.c.l.b16 %v325
        %v1782 = vunpack.c.l.b16 %v326
        %v1783 = vunpack.c.l.b16 %v327
        %v1784 = vunpack.c.l.b16 %v328
        %v1785 = vunpack.c.l.b16 %v329
        %v1786 = vunpack.c.l.b16 %v330
        %v1787 = vunpack.c.l.b16 %v331
        %v1788 = vunpack.c.l.b16 %v332
        %v1789 = vunpack.c.l.b16 %v333
        %v1790 = vunpack.c.l.b16 %v334
        %v1791 = vunpack.c.l.b16 %v335
        %v1792 = vunpack.c.l.b16 %v336
        %v1793 = vunpack.c.l.b16 %v337
        %v1794 = vunpack.c.l.b16 %v338
        %v1795 = vunpack.c.l.b16 %v339
        %v1796 = vunpack.c.l.b16 %v340
        %v1797 = vunpack.c.l.b16 %v341
        %v1798 = vunpack.c.l.b16 %v342
        %v1799 = vunpack.c.l.b16 %v343
        %v1800 = vunpack.c.l.b16 %v344
        %v1801 = vunpack.c.l.b16 %v345
        %v1802 = vunpack.c.l.b16 %v346
        %v1803 = vunpack.c.l.b16 %v347
        %v1804 = vunpack.c.l.b16 %v348
        %v1805 = vunpack.c.l.b16 %v349
        %v1806 = vunpack.c.l.b16 %v350
        %v1807 = vunpack.c.l.b16 %v351
        %v1808 = vpack.c.b16 %v1777, %v1776
        %v1809 = vpack.c.b16 %v1779, %v1778
        %v1810 = vpack.c.b16 %v1781, %v1780
        %v1811 = vpack.c.b16 %v1783, %v1782
        %v1812 = vpack.c.b16 %v1785, %v1784
        %v1813 = vpack.c.b16 %v1787, %v1786
        %v1814 = vpack.c.b16 %v1789, %v1788
        %v1815 = vpack.c.b16 %v1791, %v1790
        %v1816 = vpack.c.b16 %v1793, %v1792
        %v1817 = vpack.c.b16 %v1795, %v1794
        %v1818 = vpack.c.b16 %v1797, %v1796
        %v1819 = vpack.c.b16 %v1799, %v1798
        %v1820 = vpack.c.b16 %v1801, %v1800
        %v1821 = vpack.c.b16 %v1803, %v1802
        %v1822 = vpack.c.b16 %v1805, %v1804
        %v1823 = vpack.c.b16 %v1807, %v1806
        %1840 = vmatprep.subr.bf16.mxu0 0
        %1841 = vmatpush1.bf16.msra.mxu0 %v1808
        %1842 = vmatprep.subr.bf16.mxu0 0
        %1843 = vmatpush1.bf16.msra.mxu0 %v1809
        %1844 = vmatprep.subr.bf16.mxu0 0
        %1845 = vmatpush1.bf16.msra.mxu0 %v1810
        %1846 = vmatprep.subr.bf16.mxu0 0
        %1847 = vmatpush1.bf16.msra.mxu0 %v1811
        %1848 = vmatprep.subr.bf16.mxu0 0
        %1849 = vmatpush1.bf16.msra.mxu0 %v1812
        %1850 = vmatprep.subr.bf16.mxu0 0
        %1851 = vmatpush1.bf16.msra.mxu0 %v1813
        %1852 = vmatprep.subr.bf16.mxu0 0
        %1853 = vmatpush1.bf16.msra.mxu0 %v1814
        %1854 = vmatprep.subr.bf16.mxu0 0
        %1855 = vmatpush1.bf16.msra.mxu0 %v1815
        %1856 = vmatprep.subr.bf16.mxu0 0
        %1857 = vmatpush1.bf16.msra.mxu0 %v1816
        %1858 = vmatprep.subr.bf16.mxu0 0
        %1859 = vmatpush1.bf16.msra.mxu0 %v1817
        %1860 = vmatprep.subr.bf16.mxu0 0
        %1861 = vmatpush1.bf16.msra.mxu0 %v1818
        %1862 = vmatprep.subr.bf16.mxu0 0
        %1863 = vmatpush1.bf16.msra.mxu0 %v1819
        %1864 = vmatprep.subr.bf16.mxu0 0
        %1865 = vmatpush1.bf16.msra.mxu0 %v1820
        %1866 = vmatprep.subr.bf16.mxu0 0
        %1867 = vmatpush1.bf16.msra.mxu0 %v1821
        %1868 = vmatprep.subr.bf16.mxu0 0
        %1869 = vmatpush1.bf16.msra.mxu0 %v1822
        %1870 = vmatprep.subr.bf16.mxu0 0
        %1871 = vmatpush1.bf16.msra.mxu0 %v1823
        %1872 = vmatprep.mubr.bf16.mxu0 %v1713
        %1873 = vmatmul.mubr.bf16.gmra.mrb[0].mxu0 %v1712
        %v1874 = vpop.f32.mrb[0].mxu0
        %v1875 = vadd.f32 0.0, %v1874
        %v1876 = vpop.f32.mrb[0].mxu0
        %v1877 = vpop.f32.mrb[0].mxu0
        %v1878 = vadd.f32 0.0, %v1877
        %v1879 = vpop.f32.mrb[0].mxu0
        %1880 = vmatprep.mubr.bf16.mxu0 %v1715
        %1881 = vmatmul.mubr.bf16.gmra.mrb[0].mxu0 %v1714
        %v1882 = vpop.f32.mrb[0].mxu0
        %v1883 = vadd.f32 0.0, %v1882
        %v1884 = vpop.f32.mrb[0].mxu0
        %v1885 = vpop.f32.mrb[0].mxu0
        %v1886 = vadd.f32 0.0, %v1885
        %v1887 = vpop.f32.mrb[0].mxu0
        %1888 = vmatprep.mubr.bf16.mxu0 %v1717
        %1889 = vmatmul.mubr.bf16.gmra.mrb[0].mxu0 %v1716
        %v1890 = vpop.f32.mrb[0].mxu0
        %v1891 = vadd.f32 0.0, %v1890
        %v1892 = vpop.f32.mrb[0].mxu0
        %v1893 = vpop.f32.mrb[0].mxu0
        %v1894 = vadd.f32 0.0, %v1893
        %v1895 = vpop.f32.mrb[0].mxu0
        %1896 = vmatprep.mubr.bf16.mxu0 %v1719
        %1897 = vmatmul.mubr.bf16.gmra.mrb[0].mxu0 %v1718
        %v1898 = vpop.f32.mrb[0].mxu0
        %v1899 = vadd.f32 0.0, %v1898
        %v1900 = vpop.f32.mrb[0].mxu0
        %v1901 = vpop.f32.mrb[0].mxu0
        %v1902 = vadd.f32 0.0, %v1901
        %v1903 = vpop.f32.mrb[0].mxu0
        %1904 = vmatprep.mubr.bf16.mxu0 %v1721
        %1905 = vmatmul.mubr.bf16.gmra.mrb[0].mxu0 %v1720
        %v1906 = vpop.f32.mrb[0].mxu0
        %v1907 = vadd.f32 0.0, %v1906
        %v1908 = vpop.f32.mrb[0].mxu0
        %v1909 = vpop.f32.mrb[0].mxu0
        %v1910 = vadd.f32 0.0, %v1909
        %v1911 = vpop.f32.mrb[0].mxu0
        %1912 = vmatprep.mubr.bf16.mxu0 %v1723
        %1913 = vmatmul.mubr.bf16.gmra.mrb[0].mxu0 %v1722
        %v1914 = vpop.f32.mrb[0].mxu0
        %v1915 = vadd.f32 0.0, %v1914
        %v1916 = vpop.f32.mrb[0].mxu0
        %v1917 = vpop.f32.mrb[0].mxu0
        %v1918 = vadd.f32 0.0, %v1917
        %v1919 = vpop.f32.mrb[0].mxu0
        %1920 = vmatprep.mubr.bf16.mxu0 %v1725
        %1921 = vmatmul.mubr.bf16.gmra.mrb[0].mxu0 %v1724
        %v1922 = vpop.f32.mrb[0].mxu0
        %v1923 = vadd.f32 0.0, %v1922
        %v1924 = vpop.f32.mrb[0].mxu0
        %v1925 = vpop.f32.mrb[0].mxu0
        %v1926 = vadd.f32 0.0, %v1925
        %v1927 = vpop.f32.mrb[0].mxu0
        %1928 = vmatprep.mubr.bf16.mxu0 %v1727
        %1929 = vmatmul.mubr.bf16.gmra.mrb[0].mxu0 %v1726
        %v1930 = vpop.f32.mrb[0].mxu0
        %v1931 = vadd.f32 0.0, %v1930
        %v1932 = vpop.f32.mrb[0].mxu0
        %v1933 = vpop.f32.mrb[0].mxu0
        %v1934 = vadd.f32 0.0, %v1933
        %v1935 = vpop.f32.mrb[0].mxu0
        %1936 = vmatprep.mubr.bf16.mxu0 %v1729
        %1937 = vmatmul.mubr.bf16.gmra.mrb[0].mxu0 %v1728
        %v1938 = vpop.f32.mrb[0].mxu0
        %v1939 = vadd.f32 0.0, %v1938
        %v1940 = vpop.f32.mrb[0].mxu0
        %v1941 = vpop.f32.mrb[0].mxu0
        %v1942 = vadd.f32 0.0, %v1941
        %v1943 = vpop.f32.mrb[0].mxu0
        %1944 = vmatprep.mubr.bf16.mxu0 %v1731
        %1945 = vmatmul.mubr.bf16.gmra.mrb[0].mxu0 %v1730
        %v1946 = vpop.f32.mrb[0].mxu0
        %v1947 = vadd.f32 0.0, %v1946
        %v1948 = vpop.f32.mrb[0].mxu0
        %v1949 = vpop.f32.mrb[0].mxu0
        %v1950 = vadd.f32 0.0, %v1949
        %v1951 = vpop.f32.mrb[0].mxu0
        %1952 = vmatprep.mubr.bf16.mxu0 %v1733
        %1953 = vmatmul.mubr.bf16.gmra.mrb[0].mxu0 %v1732
        %v1954 = vpop.f32.mrb[0].mxu0
        %v1955 = vadd.f32 0.0, %v1954
        %v1956 = vpop.f32.mrb[0].mxu0
        %v1957 = vpop.f32.mrb[0].mxu0
        %v1958 = vadd.f32 0.0, %v1957
        %v1959 = vpop.f32.mrb[0].mxu0
        %1960 = vmatprep.mubr.bf16.mxu0 %v1735
        %1961 = vmatmul.mubr.bf16.gmra.mrb[0].mxu0 %v1734
        %v1962 = vpop.f32.mrb[0].mxu0
        %v1963 = vadd.f32 0.0, %v1962
        %v1964 = vpop.f32.mrb[0].mxu0
        %v1965 = vpop.f32.mrb[0].mxu0
        %v1966 = vadd.f32 0.0, %v1965
        %v1967 = vpop.f32.mrb[0].mxu0
        %1968 = vmatprep.mubr.bf16.mxu0 %v1737
        %1969 = vmatmul.mubr.bf16.gmra.mrb[0].mxu0 %v1736
        %v1970 = vpop.f32.mrb[0].mxu0
        %v1971 = vadd.f32 0.0, %v1970
        %v1972 = vpop.f32.mrb[0].mxu0
        %v1973 = vpop.f32.mrb[0].mxu0
        %v1974 = vadd.f32 0.0, %v1973
        %v1975 = vpop.f32.mrb[0].mxu0
        %1976 = vmatprep.mubr.bf16.mxu0 %v1739
        %1977 = vmatmul.mubr.bf16.gmra.mrb[0].mxu0 %v1738
        %v1978 = vpop.f32.mrb[0].mxu0
        %v1979 = vadd.f32 0.0, %v1978
        %v1980 = vpop.f32.mrb[0].mxu0
        %v1981 = vpop.f32.mrb[0].mxu0
        %v1982 = vadd.f32 0.0, %v1981
        %v1983 = vpop.f32.mrb[0].mxu0
        %1984 = vmatprep.mubr.bf16.mxu0 %v1741
        %1985 = vmatmul.mubr.bf16.gmra.mrb[0].mxu0 %v1740
        %v1986 = vpop.f32.mrb[0].mxu0
        %v1987 = vadd.f32 0.0, %v1986
        %v1988 = vpop.f32.mrb[0].mxu0
        %v1989 = vpop.f32.mrb[0].mxu0
        %v1990 = vadd.f32 0.0, %v1989
        %v1991 = vpop.f32.mrb[0].mxu0
        %1992 = vmatprep.mubr.bf16.mxu0 %v1743
        %1993 = vmatmul.mubr.bf16.gmra.mrb[0].mxu0 %v1742
        %v1994 = vpop.f32.mrb[0].mxu0
        %v1995 = vadd.f32 0.0, %v1994
        %v1996 = vpop.f32.mrb[0].mxu0
        %v1997 = vpop.f32.mrb[0].mxu0
        %v1998 = vadd.f32 0.0, %v1997
        %v1999 = vpop.f32.mrb[0].mxu0
        %2000 = vdwg.mxu0
        %v2001 = vadd.f32 %v1680, %v1875
        %v2002 = vadd.f32 %v1681, %v1878
        %v2003 = vadd.f32 %v1682, %v1883
        %v2004 = vadd.f32 %v1683, %v1886
        %v2005 = vadd.f32 %v1684, %v1891
        %v2006 = vadd.f32 %v1685, %v1894
        %v2007 = vadd.f32 %v1686, %v1899
        %v2008 = vadd.f32 %v1687, %v1902
        %v2009 = vadd.f32 %v1688, %v1907
        %v2010 = vadd.f32 %v1689, %v1910
        %v2011 = vadd.f32 %v1690, %v1915
        %v2012 = vadd.f32 %v1691, %v1918
        %v2013 = vadd.f32 %v1692, %v1923
        %v2014 = vadd.f32 %v1693, %v1926
        %v2015 = vadd.f32 %v1694, %v1931
        %v2016 = vadd.f32 %v1695, %v1934
        %v2017 = vadd.f32 %v1696, %v1939
        %v2018 = vadd.f32 %v1697, %v1942
        %v2019 = vadd.f32 %v1698, %v1947
        %v2020 = vadd.f32 %v1699, %v1950
        %v2021 = vadd.f32 %v1700, %v1955
        %v2022 = vadd.f32 %v1701, %v1958
        %v2023 = vadd.f32 %v1702, %v1963
        %v2024 = vadd.f32 %v1703, %v1966
        %v2025 = vadd.f32 %v1704, %v1971
        %v2026 = vadd.f32 %v1705, %v1974
        %v2027 = vadd.f32 %v1706, %v1979
        %v2028 = vadd.f32 %v1707, %v1982
        %v2029 = vadd.f32 %v1708, %v1987
        %v2030 = vadd.f32 %v1709, %v1990
        %v2031 = vadd.f32 %v1710, %v1995
        %v2032 = vadd.f32 %v1711, %v1998
        %vm2033 = vcmask 130048
        %2034 = vst.msk [vmem:[#allocation2] sm:$0xff] %vm2033, %v2001
        %2035 = vst.msk [vmem:[#allocation2 + $0x8] sm:$0xff] %vm2033, %v2002
        %2036 = vst.msk [vmem:[#allocation2 + $0x10] sm:$0xff] %vm2033, %v2003
        %2037 = vst.msk [vmem:[#allocation2 + $0x18] sm:$0xff] %vm2033, %v2004
        %2038 = vst.msk [vmem:[#allocation2 + $0x20] sm:$0xff] %vm2033, %v2005
        %2039 = vst.msk [vmem:[#allocation2 + $0x28] sm:$0xff] %vm2033, %v2006
        %2040 = vst.msk [vmem:[#allocation2 + $0x30] sm:$0xff] %vm2033, %v2007
        %2041 = vst.msk [vmem:[#allocation2 + $0x38] sm:$0xff] %vm2033, %v2008
        %2042 = vst.msk [vmem:[#allocation2 + $0x40] sm:$0xff] %vm2033, %v2009
        %2043 = vst.msk [vmem:[#allocation2 + $0x48] sm:$0xff] %vm2033, %v2010
        %2044 = vst.msk [vmem:[#allocation2 + $0x50] sm:$0xff] %vm2033, %v2011
        %2045 = vst.msk [vmem:[#allocation2 + $0x58] sm:$0xff] %vm2033, %v2012
        %2046 = vst.msk [vmem:[#allocation2 + $0x60] sm:$0xff] %vm2033, %v2013
        %2047 = vst.msk [vmem:[#allocation2 + $0x68] sm:$0xff] %vm2033, %v2014
        %2048 = vst.msk [vmem:[#allocation2 + $0x70] sm:$0xff] %vm2033, %v2015
        %2049 = vst.msk [vmem:[#allocation2 + $0x78] sm:$0xff] %vm2033, %v2016
        %2050 = vst.msk [vmem:[#allocation2 + $0x80] sm:$0xff] %vm2033, %v2017
        %2051 = vst.msk [vmem:[#allocation2 + $0x88] sm:$0xff] %vm2033, %v2018
        %2052 = vst.msk [vmem:[#allocation2 + $0x90] sm:$0xff] %vm2033, %v2019
        %2053 = vst.msk [vmem:[#allocation2 + $0x98] sm:$0xff] %vm2033, %v2020
        %2054 = vst.msk [vmem:[#allocation2 + $0xa0] sm:$0xff] %vm2033, %v2021
        %2055 = vst.msk [vmem:[#allocation2 + $0xa8] sm:$0xff] %vm2033, %v2022
        %2056 = vst.msk [vmem:[#allocation2 + $0xb0] sm:$0xff] %vm2033, %v2023
        %2057 = vst.msk [vmem:[#allocation2 + $0xb8] sm:$0xff] %vm2033, %v2024
        %2058 = vst.msk [vmem:[#allocation2 + $0xc0] sm:$0xff] %vm2033, %v2025
        %2059 = vst.msk [vmem:[#allocation2 + $0xc8] sm:$0xff] %vm2033, %v2026
        %2060 = vst.msk [vmem:[#allocation2 + $0xd0] sm:$0xff] %vm2033, %v2027
        %2061 = vst.msk [vmem:[#allocation2 + $0xd8] sm:$0xff] %vm2033, %v2028
        %2062 = vst.msk [vmem:[#allocation2 + $0xe0] sm:$0xff] %vm2033, %v2029
        %2063 = vst.msk [vmem:[#allocation2 + $0xe8] sm:$0xff] %vm2033, %v2030
        %2064 = vst.msk [vmem:[#allocation2 + $0xf0] sm:$0xff] %vm2033, %v2031
        %2065 = vst.msk [vmem:[#allocation2 + $0xf8] sm:$0xff] %vm2033, %v2032
        %p2066 = scmp.eq.s32.totalorder %s25, 1
        // Predicated region
        $region41: #{tpu_custom_call.1} parent=35 // pred_check
          %p2067 = pneg %p2066
        $region42: #{tpu_custom_call.1} parent=35 // pred_check_branch
          %2069 = sbr.rel (%p2067) target = $region44
        $region43: #{tpu_custom_call.1} parent=35 // pred_region
          %v2070 = vld [vmem:[#allocation2] sm:$0xff]
          %v2071 = vld [vmem:[#allocation2 + $0x8] sm:$0xff]
          %v2072 = vld [vmem:[#allocation2 + $0x10] sm:$0xff]
          %v2073 = vld [vmem:[#allocation2 + $0x18] sm:$0xff]
          %v2074 = vld [vmem:[#allocation2 + $0x20] sm:$0xff]
          %v2075 = vld [vmem:[#allocation2 + $0x28] sm:$0xff]
          %v2076 = vld [vmem:[#allocation2 + $0x30] sm:$0xff]
          %v2077 = vld [vmem:[#allocation2 + $0x38] sm:$0xff]
          %v2078 = vld [vmem:[#allocation2 + $0x40] sm:$0xff]
          %v2079 = vld [vmem:[#allocation2 + $0x48] sm:$0xff]
          %v2080 = vld [vmem:[#allocation2 + $0x50] sm:$0xff]
          %v2081 = vld [vmem:[#allocation2 + $0x58] sm:$0xff]
          %v2082 = vld [vmem:[#allocation2 + $0x60] sm:$0xff]
          %v2083 = vld [vmem:[#allocation2 + $0x68] sm:$0xff]
          %v2084 = vld [vmem:[#allocation2 + $0x70] sm:$0xff]
          %v2085 = vld [vmem:[#allocation2 + $0x78] sm:$0xff]
          %v2086 = vld [vmem:[#allocation2 + $0x80] sm:$0xff]
          %v2087 = vld [vmem:[#allocation2 + $0x88] sm:$0xff]
          %v2088 = vld [vmem:[#allocation2 + $0x90] sm:$0xff]
          %v2089 = vld [vmem:[#allocation2 + $0x98] sm:$0xff]
          %v2090 = vld [vmem:[#allocation2 + $0xa0] sm:$0xff]
          %v2091 = vld [vmem:[#allocation2 + $0xa8] sm:$0xff]
          %v2092 = vld [vmem:[#allocation2 + $0xb0] sm:$0xff]
          %v2093 = vld [vmem:[#allocation2 + $0xb8] sm:$0xff]
          %v2094 = vld [vmem:[#allocation2 + $0xc0] sm:$0xff]
          %v2095 = vld [vmem:[#allocation2 + $0xc8] sm:$0xff]
          %v2096 = vld [vmem:[#allocation2 + $0xd0] sm:$0xff]
          %v2097 = vld [vmem:[#allocation2 + $0xd8] sm:$0xff]
          %v2098 = vld [vmem:[#allocation2 + $0xe0] sm:$0xff]
          %v2099 = vld [vmem:[#allocation2 + $0xe8] sm:$0xff]
          %v2100 = vld [vmem:[#allocation2 + $0xf0] sm:$0xff]
          %v2101 = vld [vmem:[#allocation2 + $0xf8] sm:$0xff]
          %v2102 = vsub.f32 1.0, %v2070
          %v2103 = vsub.f32 1.0, %v2071
          %v2104 = vsub.f32 1.0, %v2072
          %v2105 = vsub.f32 1.0, %v2073
          %v2106 = vsub.f32 1.0, %v2074
          %v2107 = vsub.f32 1.0, %v2075
          %v2108 = vsub.f32 1.0, %v2076
          %v2109 = vsub.f32 1.0, %v2077
          %v2110 = vsub.f32 1.0, %v2078
          %v2111 = vsub.f32 1.0, %v2079
          %v2112 = vsub.f32 1.0, %v2080
          %v2113 = vsub.f32 1.0, %v2081
          %v2114 = vsub.f32 1.0, %v2082
          %v2115 = vsub.f32 1.0, %v2083
          %v2116 = vsub.f32 1.0, %v2084
          %v2117 = vsub.f32 1.0, %v2085
          %v2118 = vsub.f32 1.0, %v2086
          %v2119 = vsub.f32 1.0, %v2087
          %v2120 = vsub.f32 1.0, %v2088
          %v2121 = vsub.f32 1.0, %v2089
          %v2122 = vsub.f32 1.0, %v2090
          %v2123 = vsub.f32 1.0, %v2091
          %v2124 = vsub.f32 1.0, %v2092
          %v2125 = vsub.f32 1.0, %v2093
          %v2126 = vsub.f32 1.0, %v2094
          %v2127 = vsub.f32 1.0, %v2095
          %v2128 = vsub.f32 1.0, %v2096
          %v2129 = vsub.f32 1.0, %v2097
          %v2130 = vsub.f32 1.0, %v2098
          %v2131 = vsub.f32 1.0, %v2099
          %v2132 = vsub.f32 1.0, %v2100
          %v2133 = vsub.f32 1.0, %v2101
          %v2134 = vmax.f32 %v2102, 0.0
          %v2135 = vmax.f32 %v2103, 0.0
          %v2136 = vmax.f32 %v2104, 0.0
          %v2137 = vmax.f32 %v2105, 0.0
          %v2138 = vmax.f32 %v2106, 0.0
          %v2139 = vmax.f32 %v2107, 0.0
          %v2140 = vmax.f32 %v2108, 0.0
          %v2141 = vmax.f32 %v2109, 0.0
          %v2142 = vmax.f32 %v2110, 0.0
          %v2143 = vmax.f32 %v2111, 0.0
          %v2144 = vmax.f32 %v2112, 0.0
          %v2145 = vmax.f32 %v2113, 0.0
          %v2146 = vmax.f32 %v2114, 0.0
          %v2147 = vmax.f32 %v2115, 0.0
          %v2148 = vmax.f32 %v2116, 0.0
          %v2149 = vmax.f32 %v2117, 0.0
          %v2150 = vmax.f32 %v2118, 0.0
          %v2151 = vmax.f32 %v2119, 0.0
          %v2152 = vmax.f32 %v2120, 0.0
          %v2153 = vmax.f32 %v2121, 0.0
          %v2154 = vmax.f32 %v2122, 0.0
          %v2155 = vmax.f32 %v2123, 0.0
          %v2156 = vmax.f32 %v2124, 0.0
          %v2157 = vmax.f32 %v2125, 0.0
          %v2158 = vmax.f32 %v2126, 0.0
          %v2159 = vmax.f32 %v2127, 0.0
          %v2160 = vmax.f32 %v2128, 0.0
          %v2161 = vmax.f32 %v2129, 0.0
          %v2162 = vmax.f32 %v2130, 0.0
          %v2163 = vmax.f32 %v2131, 0.0
          %v2164 = vmax.f32 %v2132, 0.0
          %v2165 = vmax.f32 %v2133, 0.0
          %v2166 = vmin.f32 %v2134, 1.0
          %v2167 = vmin.f32 %v2135, 1.0
          %v2168 = vmin.f32 %v2136, 1.0
          %v2169 = vmin.f32 %v2137, 1.0
          %v2170 = vmin.f32 %v2138, 1.0
          %v2171 = vmin.f32 %v2139, 1.0
          %v2172 = vmin.f32 %v2140, 1.0
          %v2173 = vmin.f32 %v2141, 1.0
          %v2174 = vmin.f32 %v2142, 1.0
          %v2175 = vmin.f32 %v2143, 1.0
          %v2176 = vmin.f32 %v2144, 1.0
          %v2177 = vmin.f32 %v2145, 1.0
          %v2178 = vmin.f32 %v2146, 1.0
          %v2179 = vmin.f32 %v2147, 1.0
          %v2180 = vmin.f32 %v2148, 1.0
          %v2181 = vmin.f32 %v2149, 1.0
          %v2182 = vmin.f32 %v2150, 1.0
          %v2183 = vmin.f32 %v2151, 1.0
          %v2184 = vmin.f32 %v2152, 1.0
          %v2185 = vmin.f32 %v2153, 1.0
          %v2186 = vmin.f32 %v2154, 1.0
          %v2187 = vmin.f32 %v2155, 1.0
          %v2188 = vmin.f32 %v2156, 1.0
          %v2189 = vmin.f32 %v2157, 1.0
          %v2190 = vmin.f32 %v2158, 1.0
          %v2191 = vmin.f32 %v2159, 1.0
          %v2192 = vmin.f32 %v2160, 1.0
          %v2193 = vmin.f32 %v2161, 1.0
          %v2194 = vmin.f32 %v2162, 1.0
          %v2195 = vmin.f32 %v2163, 1.0
          %v2196 = vmin.f32 %v2164, 1.0
          %v2197 = vmin.f32 %v2165, 1.0
          %v2198 = vld [vmem:[%s272] sm:$0x1]
          %2200 = vset.pattern.permute.xlu0 11
          %2201 = vperm.xlu0 %2200, %v2166
          %v2202 = vpop.permute.xlu0 %2201
          %2205 = vset.pattern.permute.xlu0 11
          %2206 = vperm.xlu0 %2205, %v2167
          %v2207 = vpop.permute.xlu0 %2206
          %2210 = vset.pattern.permute.xlu0 11
          %2211 = vperm.xlu0 %2210, %v2168
          %v2212 = vpop.permute.xlu0 %2211
          %2215 = vset.pattern.permute.xlu0 11
          %2216 = vperm.xlu0 %2215, %v2169
          %v2217 = vpop.permute.xlu0 %2216
          %2220 = vset.pattern.permute.xlu0 11
          %2221 = vperm.xlu0 %2220, %v2170
          %v2222 = vpop.permute.xlu0 %2221
          %2225 = vset.pattern.permute.xlu0 11
          %2226 = vperm.xlu0 %2225, %v2171
          %v2227 = vpop.permute.xlu0 %2226
          %2230 = vset.pattern.permute.xlu0 11
          %2231 = vperm.xlu0 %2230, %v2172
          %v2232 = vpop.permute.xlu0 %2231
          %2235 = vset.pattern.permute.xlu0 11
          %2236 = vperm.xlu0 %2235, %v2173
          %v2237 = vpop.permute.xlu0 %2236
          %2240 = vset.pattern.permute.xlu0 11
          %2241 = vperm.xlu0 %2240, %v2174
          %v2242 = vpop.permute.xlu0 %2241
          %2245 = vset.pattern.permute.xlu0 11
          %2246 = vperm.xlu0 %2245, %v2175
          %v2247 = vpop.permute.xlu0 %2246
          %2250 = vset.pattern.permute.xlu0 11
          %2251 = vperm.xlu0 %2250, %v2176
          %v2252 = vpop.permute.xlu0 %2251
          %2255 = vset.pattern.permute.xlu0 11
          %2256 = vperm.xlu0 %2255, %v2177
          %v2257 = vpop.permute.xlu0 %2256
          %2260 = vset.pattern.permute.xlu0 11
          %2261 = vperm.xlu0 %2260, %v2178
          %v2262 = vpop.permute.xlu0 %2261
          %2265 = vset.pattern.permute.xlu0 11
          %2266 = vperm.xlu0 %2265, %v2179
          %v2267 = vpop.permute.xlu0 %2266
          %2270 = vset.pattern.permute.xlu0 11
          %2271 = vperm.xlu0 %2270, %v2180
          %v2272 = vpop.permute.xlu0 %2271
          %2275 = vset.pattern.permute.xlu0 11
          %2276 = vperm.xlu0 %2275, %v2181
          %v2277 = vpop.permute.xlu0 %2276
          %2280 = vset.pattern.permute.xlu0 11
          %2281 = vperm.xlu0 %2280, %v2182
          %v2282 = vpop.permute.xlu0 %2281
          %2285 = vset.pattern.permute.xlu0 11
          %2286 = vperm.xlu0 %2285, %v2183
          %v2287 = vpop.permute.xlu0 %2286
          %2290 = vset.pattern.permute.xlu0 11
          %2291 = vperm.xlu0 %2290, %v2184
          %v2292 = vpop.permute.xlu0 %2291
          %2295 = vset.pattern.permute.xlu0 11
          %2296 = vperm.xlu0 %2295, %v2185
          %v2297 = vpop.permute.xlu0 %2296
          %2300 = vset.pattern.permute.xlu0 11
          %2301 = vperm.xlu0 %2300, %v2186
          %v2302 = vpop.permute.xlu0 %2301
          %2305 = vset.pattern.permute.xlu0 11
          %2306 = vperm.xlu0 %2305, %v2187
          %v2307 = vpop.permute.xlu0 %2306
          %2310 = vset.pattern.permute.xlu0 11
          %2311 = vperm.xlu0 %2310, %v2188
          %v2312 = vpop.permute.xlu0 %2311
          %2315 = vset.pattern.permute.xlu0 11
          %2316 = vperm.xlu0 %2315, %v2189
          %v2317 = vpop.permute.xlu0 %2316
          %2320 = vset.pattern.permute.xlu0 11
          %2321 = vperm.xlu0 %2320, %v2190
          %v2322 = vpop.permute.xlu0 %2321
          %2325 = vset.pattern.permute.xlu0 11
          %2326 = vperm.xlu0 %2325, %v2191
          %v2327 = vpop.permute.xlu0 %2326
          %2330 = vset.pattern.permute.xlu0 11
          %2331 = vperm.xlu0 %2330, %v2192
          %v2332 = vpop.permute.xlu0 %2331
          %2335 = vset.pattern.permute.xlu0 11
          %2336 = vperm.xlu0 %2335, %v2193
          %v2337 = vpop.permute.xlu0 %2336
          %2340 = vset.pattern.permute.xlu0 11
          %2341 = vperm.xlu0 %2340, %v2194
          %v2342 = vpop.permute.xlu0 %2341
          %2345 = vset.pattern.permute.xlu0 11
          %2346 = vperm.xlu0 %2345, %v2195
          %v2347 = vpop.permute.xlu0 %2346
          %2350 = vset.pattern.permute.xlu0 11
          %2351 = vperm.xlu0 %2350, %v2196
          %v2352 = vpop.permute.xlu0 %2351
          %2355 = vset.pattern.permute.xlu0 11
          %2356 = vperm.xlu0 %2355, %v2197
          %v2357 = vpop.permute.xlu0 %2356
          %v2360 = vlaneseq
          %v2361 = vshrl.u32 %v2360, 7
          %v2362 = vsub.s32 0, %v2361
          %v2363 = vrot.slane %v2198, %v2362
          %v2365 = vmul.f32 %v2202, %v2363
          %v2366 = vmul.f32 %v2207, %v2363
          %v2367 = vmul.f32 %v2212, %v2363
          %v2368 = vmul.f32 %v2217, %v2363
          %v2369 = vmul.f32 %v2222, %v2363
          %v2370 = vmul.f32 %v2227, %v2363
          %v2371 = vmul.f32 %v2232, %v2363
          %v2372 = vmul.f32 %v2237, %v2363
          %v2373 = vmul.f32 %v2242, %v2363
          %v2374 = vmul.f32 %v2247, %v2363
          %v2375 = vmul.f32 %v2252, %v2363
          %v2376 = vmul.f32 %v2257, %v2363
          %v2377 = vmul.f32 %v2262, %v2363
          %v2378 = vmul.f32 %v2267, %v2363
          %v2379 = vmul.f32 %v2272, %v2363
          %v2380 = vmul.f32 %v2277, %v2363
          %v2381 = vmul.f32 %v2282, %v2363
          %v2382 = vmul.f32 %v2287, %v2363
          %v2383 = vmul.f32 %v2292, %v2363
          %v2384 = vmul.f32 %v2297, %v2363
          %v2385 = vmul.f32 %v2302, %v2363
          %v2386 = vmul.f32 %v2307, %v2363
          %v2387 = vmul.f32 %v2312, %v2363
          %v2388 = vmul.f32 %v2317, %v2363
          %v2389 = vmul.f32 %v2322, %v2363
          %v2390 = vmul.f32 %v2327, %v2363
          %v2391 = vmul.f32 %v2332, %v2363
          %v2392 = vmul.f32 %v2337, %v2363
          %v2393 = vmul.f32 %v2342, %v2363
          %v2394 = vmul.f32 %v2347, %v2363
          %v2395 = vmul.f32 %v2352, %v2363
          %v2396 = vmul.f32 %v2357, %v2363
          %v2397 = vadd.f32 %v2070, %v2365
          %v2398 = vadd.f32 %v2071, %v2366
          %v2399 = vadd.f32 %v2072, %v2367
          %v2400 = vadd.f32 %v2073, %v2368
          %v2401 = vadd.f32 %v2074, %v2369
          %v2402 = vadd.f32 %v2075, %v2370
          %v2403 = vadd.f32 %v2076, %v2371
          %v2404 = vadd.f32 %v2077, %v2372
          %v2405 = vadd.f32 %v2078, %v2373
          %v2406 = vadd.f32 %v2079, %v2374
          %v2407 = vadd.f32 %v2080, %v2375
          %v2408 = vadd.f32 %v2081, %v2376
          %v2409 = vadd.f32 %v2082, %v2377
          %v2410 = vadd.f32 %v2083, %v2378
          %v2411 = vadd.f32 %v2084, %v2379
          %v2412 = vadd.f32 %v2085, %v2380
          %v2413 = vadd.f32 %v2086, %v2381
          %v2414 = vadd.f32 %v2087, %v2382
          %v2415 = vadd.f32 %v2088, %v2383
          %v2416 = vadd.f32 %v2089, %v2384
          %v2417 = vadd.f32 %v2090, %v2385
          %v2418 = vadd.f32 %v2091, %v2386
          %v2419 = vadd.f32 %v2092, %v2387
          %v2420 = vadd.f32 %v2093, %v2388
          %v2421 = vadd.f32 %v2094, %v2389
          %v2422 = vadd.f32 %v2095, %v2390
          %v2423 = vadd.f32 %v2096, %v2391
          %v2424 = vadd.f32 %v2097, %v2392
          %v2425 = vadd.f32 %v2098, %v2393
          %v2426 = vadd.f32 %v2099, %v2394
          %v2427 = vadd.f32 %v2100, %v2395
          %v2428 = vadd.f32 %v2101, %v2396
          %2429 = vxpose.xlu0.b32.start [1/16] %v2397, 128
          %2430 = vxpose.xlu0.b32.cont [2/16] %v2398, 128
          %2431 = vxpose.xlu0.b32.cont [3/16] %v2399, 128
          %2432 = vxpose.xlu0.b32.cont [4/16] %v2400, 128
          %2433 = vxpose.xlu0.b32.cont [5/16] %v2401, 128
          %2434 = vxpose.xlu0.b32.cont [6/16] %v2402, 128
          %2435 = vxpose.xlu0.b32.cont [7/16] %v2403, 128
          %2436 = vxpose.xlu0.b32.cont [8/16] %v2404, 128
          %2437 = vxpose.xlu0.b32.cont [9/16] %v2405, 128
          %2438 = vxpose.xlu0.b32.cont [10/16] %v2406, 128
          %2439 = vxpose.xlu0.b32.cont [11/16] %v2407, 128
          %2440 = vxpose.xlu0.b32.cont [12/16] %v2408, 128
          %2441 = vxpose.xlu0.b32.cont [13/16] %v2409, 128
          %2442 = vxpose.xlu0.b32.cont [14/16] %v2410, 128
          %2443 = vxpose.xlu0.b32.cont [15/16] %v2411, 128
          %2444 = vxpose.xlu0.b32.end [16/16] %v2412, 128
          %v2445 = vpop.trf.xlu0
          %v2446 = vpop.trf.xlu0
          %v2447 = vpop.trf.xlu0
          %v2448 = vpop.trf.xlu0
          %v2449 = vpop.trf.xlu0
          %v2450 = vpop.trf.xlu0
          %v2451 = vpop.trf.xlu0
          %v2452 = vpop.trf.xlu0
          %v2453 = vpop.trf.xlu0
          %v2454 = vpop.trf.xlu0
          %v2455 = vpop.trf.xlu0
          %v2456 = vpop.trf.xlu0
          %v2457 = vpop.trf.xlu0
          %v2458 = vpop.trf.xlu0
          %v2459 = vpop.trf.xlu0
          %v2460 = vpop.trf.xlu0
          %2461 = vxpose.xlu0.b32.start [1/16] %v2413, 128
          %2462 = vxpose.xlu0.b32.cont [2/16] %v2414, 128
          %2463 = vxpose.xlu0.b32.cont [3/16] %v2415, 128
          %2464 = vxpose.xlu0.b32.cont [4/16] %v2416, 128
          %2465 = vxpose.xlu0.b32.cont [5/16] %v2417, 128
          %2466 = vxpose.xlu0.b32.cont [6/16] %v2418, 128
          %2467 = vxpose.xlu0.b32.cont [7/16] %v2419, 128
          %2468 = vxpose.xlu0.b32.cont [8/16] %v2420, 128
          %2469 = vxpose.xlu0.b32.cont [9/16] %v2421, 128
          %2470 = vxpose.xlu0.b32.cont [10/16] %v2422, 128
          %2471 = vxpose.xlu0.b32.cont [11/16] %v2423, 128
          %2472 = vxpose.xlu0.b32.cont [12/16] %v2424, 128
          %2473 = vxpose.xlu0.b32.cont [13/16] %v2425, 128
          %2474 = vxpose.xlu0.b32.cont [14/16] %v2426, 128
          %2475 = vxpose.xlu0.b32.cont [15/16] %v2427, 128
          %2476 = vxpose.xlu0.b32.end [16/16] %v2428, 128
          %v2477 = vpop.trf.xlu0
          %v2478 = vpop.trf.xlu0
          %v2479 = vpop.trf.xlu0
          %v2480 = vpop.trf.xlu0
          %v2481 = vpop.trf.xlu0
          %v2482 = vpop.trf.xlu0
          %v2483 = vpop.trf.xlu0
          %v2484 = vpop.trf.xlu0
          %v2485 = vpop.trf.xlu0
          %v2486 = vpop.trf.xlu0
          %v2487 = vpop.trf.xlu0
          %v2488 = vpop.trf.xlu0
          %v2489 = vpop.trf.xlu0
          %v2490 = vpop.trf.xlu0
          %v2491 = vpop.trf.xlu0
          %v2492 = vpop.trf.xlu0
          %2493 = vst [vmem:[%s253] sm:$0xff] %v2445
          %2494 = vst [vmem:[%s253 + $0x8] sm:$0xff] %v2477
          %2495 = vst [vmem:[%s253 + $0x10] sm:$0xff] %v2446
          %2496 = vst [vmem:[%s253 + $0x18] sm:$0xff] %v2478
        $region44: #{tpu_custom_call.1} parent=35 // pred_fallthru
          _
        %s2497 = sand.u32 %s151, 1
        %s2498 = scalar_lea.sflag [#allocation4], %s2497
        %s2499 = sand.u32 %s151, 1
        %s2500 = smul.addr %s2499, 32
        %s2501 = scalar_lea.vmem [#allocation3], %s2500
        // Predicated region
        $region45: #{tpu_custom_call.1} parent=35 // pred_check
          %p2502 = pneg %p161
        $region46: #{tpu_custom_call.1} parent=35 // pred_check_branch
          %2504 = sbr.rel (%p2502) target = $region48
        $region47: #{tpu_custom_call.1} parent=35 // pred_region
          %s2505 = smul.u32 2, %s24
          %s2507 = ssub.s32 512, 512
          %2508 = vsyncadd %s2498, %s2507
          %s2509 = smul.addr %s23, 4
          %s2510 = sadd.s32 %s2505, %s2509
          %s2511 = smul.addr %s2510, 128
          %s2512 = scalar_lea.hbm %s4, %s2511
          %s2513 = sshll.u32 %s2501, 4
          %s2514 = int_to_ptr.vmem [resolvable:$true] %s2513
          %2519 = dma.vmem_to_hbm [thread:$0]  %s2514, 512, %s2512, %s2498, 256, 256, 16
        $region48: #{tpu_custom_call.1} parent=35 // pred_fallthru
          _
      $region36: #{tpu_custom_call.1} parent=5 // pred_fallthru
        _
      %p2520 = scmp.le.s32.totalorder 2, %s13
      // Predicated region
      $region49: #{tpu_custom_call.1} parent=5 // pred_check
        %p2521 = pneg %p2520
      $region50: #{tpu_custom_call.1} parent=5 // pred_check_branch
        %2523 = sbr.rel (%p2521) target = $region52
      $region51: #{tpu_custom_call.1} parent=5 // pred_region
        %s2524 = ssub.s32 %s13, 2
        // Predicated region
        $region53: #{tpu_custom_call.1} parent=51 // pred_check
          %p2525 = pneg %p167
        $region54: #{tpu_custom_call.1} parent=51 // pred_check_branch
          %2527 = sbr.rel (%p2525) target = $region56
        $region55: #{tpu_custom_call.1} parent=51 // pred_region
          %s2528 = sand.u32 %s152, 1
          %s2529 = scalar_lea.sflag [#allocation4], %s2528
          %s2530 = sand.u32 %s152, 1
          %s2531 = smul.addr %s2530, 32
          %s2532 = scalar_lea.vmem [#allocation3], %s2531
          %2533 = dma.done %s2529, 512
        $region56: #{tpu_custom_call.1} parent=51 // pred_fallthru
          _
      $region52: #{tpu_custom_call.1} parent=5 // pred_fallthru
        _
    $region6: #{tpu_custom_call.1} parent=1 // loop_footer
      %s17 = sadd.s32 1, %s13
    $region7: #{tpu_custom_call.1} parent=1 // loop_footer_branch
      %12 = sbr.rel target = $region3
    $region8: #{tpu_custom_call.1} parent=1 // loop_exit
      _
    %2534 = vsyncpa [#allocation4], 1
    %s2535 = scalar_lea.sflag [#allocation4], 1
    %2536 = vsyncpa %s2535, 1

</llo_original>
